<compile_context>
chip_gen: v5e
topology: v5e:2x2
jax: 0.10.0
libtpu: 0.0.40
codegen_flags: <defaults>
</compile_context>

<pallas_src>
import jax
import jax.numpy as jnp
from jax import lax
from jax.experimental import pallas as pl
from jax.experimental.pallas import tpu as pltpu

F32 = jnp.float32
BF16 = jnp.bfloat16

# 9 unique (dy, dx) spatial shifts of a 3x3 stencil, row-major (== torch kidx order).
_TAPS = tuple((dy, dx) for dy in (-1, 0, 1) for dx in (-1, 0, 1))
# ConvTranspose2d(4, stride=2, pad=1) phase decomposition:
# output phase r (rows) / s (cols) uses input shift d with kernel tap _PHASE_TAPS[r][d].
_PHASE_TAPS = ({0: 1, -1: 3}, {0: 2, 1: 0})


def _pad_rows(W):
    """Halo rows above/below the flattened (S, C) activation.  Must cover the
    most negative tap offset (-W - 1); multiple of 16 keeps bf16 packing tidy."""
    return ((W + 1 + 15) // 16) * 16


_VMEM_LIMIT_CACHE = [None]


def _vmem_limit_bytes():
    # generation-aware: ~48 MiB on v7x (64 MiB VMEM/TC), ~96 MiB on v5e/v6e (128 MiB)
    if _VMEM_LIMIT_CACHE[0] is None:
        cap = 128 * 1024 * 1024
        try:
            cap = int(getattr(pltpu.get_tpu_info(), "vmem_capacity_bytes", cap))
        except Exception:
            pass
        _VMEM_LIMIT_CACHE[0] = max(32 * 1024 * 1024, min((cap * 3) // 4, 96 * 1024 * 1024))
    return _VMEM_LIMIT_CACHE[0]


def _cparams():
    return pltpu.CompilerParams(dimension_semantics=("parallel",),
                                vmem_limit_bytes=_vmem_limit_bytes())


def _wspec(shape):
    """BlockSpec for a grid-invariant weight/bias: constant index map and a
    single pipeline buffer (no pointless double-buffering)."""
    rank = len(shape)

    def idx(b):
        return (0,) * rank

    try:
        return pl.BlockSpec(shape, idx, pipeline_mode=pl.Buffered(1))
    except Exception:  # older API without pipeline_mode: fall back gracefully
        return pl.BlockSpec(shape, idx)


# ----------------------------------------------------------------------------
# in-kernel helpers
# ----------------------------------------------------------------------------
def _silu(v):
    return v * (1.0 / (1.0 + jnp.exp(-v)))


def _gn_mask(C, groups):
    gs = C // groups
    row_g = lax.broadcasted_iota(jnp.int32, (C, C), 0) // gs
    col_g = lax.broadcasted_iota(jnp.int32, (C, C), 1) // gs
    return (row_g == col_g).astype(F32)


def _group_norm_rows(xf, gamma, beta, gmask, groups, eps=1e-5):
    """GroupNorm of an (N, C) slab: per-group stats over all N rows x (C/G)
    channels.  Group sums via a (C, C) block-diagonal mask matmul so the lane
    axis is never split; stats stay in f32."""
    n_rows, C = xf.shape
    gs = C // groups
    s1 = jnp.sum(xf, axis=0, keepdims=True)                    # (1, C)
    s2 = jnp.sum(xf * xf, axis=0, keepdims=True)               # (1, C)
    cnt = float(n_rows * gs)
    mean = jnp.dot(s1, gmask, preferred_element_type=F32) / cnt
    ex2 = jnp.dot(s2, gmask, preferred_element_type=F32) / cnt
    var = jnp.maximum(ex2 - mean * mean, 0.0)
    return (xf - mean) * lax.rsqrt(var + eps) * gamma + beta


# ----------------------------------------------------------------------------
# kernel: ConvTranspose2d(C, C, 4, stride=2, padding=1)
#   four 2x2 output phases computed lane-packed as one (S, 9C) @ (9C, 4C) dot
# ----------------------------------------------------------------------------
def _make_upsample_kernel(S, W, C, P):
    def kernel(x_ref, w_ref, b_ref, o_ref, pad_ref, col_ref):
        # Zero ONLY the halo rows; the center is fully overwritten below.
        # Done every grid step (cheap) so it stays correct under megacore
        # sharding of the batch axis (scratch is per-core).
        pad_ref[pl.ds(0, P), :] = jnp.zeros((P, C), BF16)
        pad_ref[pl.ds(P + S, P), :] = jnp.zeros((P, C), BF16)
        pad_ref[pl.ds(P, S), :] = x_ref[0].astype(BF16)        # single f32->bf16 cast

        x_idx = lax.broadcasted_iota(jnp.int32, (S, 1), 0) % W
        lmask = jnp.broadcast_to(x_idx >= 1, (S, C))           # hoisted boundary masks
        rmask = jnp.broadcast_to(x_idx <= W - 2, (S, C))

        # im2col: each of the 9 unique (dy,dx) shifts loaded exactly once.
        for t, (dy, dx) in enumerate(_TAPS):
            slab = pad_ref[pl.ds(P + dy * W + dx, S), :]
            if dx == -1:
                slab = jnp.where(lmask, slab, jnp.zeros_like(slab))
            elif dx == 1:
                slab = jnp.where(rmask, slab, jnp.zeros_like(slab))
            col_ref[:, pl.ds(t * C, C)] = slab

        # one MXU dot produces all four phases lane-packed -> wide stores
        acc = jnp.dot(col_ref[...], w_ref[...], preferred_element_type=F32)
        o_ref[0] = (acc + b_ref[...]).astype(o_ref.dtype)

    return kernel


# ----------------------------------------------------------------------------
# kernel: fused layer = ResNet block (GN->SiLU->conv3x3 -> +temb -> GN->SiLU->
#         conv3x3 -> +1x1 residual) [+ optional LinearAttention + GN]
# ----------------------------------------------------------------------------
def _make_layer_kernel(S, W, Cin, Cout, Cmax, P, groups, attn):
    def body(x_ref, t_ref, g1, be1, w1, b1, wt, bt, g2, be2, w2, b2, wr, br,
             attn_refs, o_ref, pad_ref, col_ref):
        # halo zeroing: once per invocation, halo rows only (see upsample note)
        pad_ref[pl.ds(0, P), :] = jnp.zeros((P, Cmax), BF16)
        pad_ref[pl.ds(P + S, P), :] = jnp.zeros((P, Cmax), BF16)

        x_idx = lax.broadcasted_iota(jnp.int32, (S, 1), 0) % W
        left_ok = x_idx >= 1
        right_ok = x_idx <= W - 2

        def conv3x3(h_f32, cin, w_ref):
            # im2col 3x3 conv: 9 shifted bf16 slab stores + one K=9*cin MXU dot
            pad_ref[pl.ds(P, S), pl.ds(0, cin)] = h_f32.astype(BF16)
            lm = jnp.broadcast_to(left_ok, (S, cin))
            rm = jnp.broadcast_to(right_ok, (S, cin))
            for t, (dy, dx) in enumerate(_TAPS):
                slab = pad_ref[pl.ds(P + dy * W + dx, S), pl.ds(0, cin)]
                if dx == -1:
                    slab = jnp.where(lm, slab, jnp.zeros_like(slab))
                elif dx == 1:
                    slab = jnp.where(rm, slab, jnp.zeros_like(slab))
                col_ref[:, pl.ds(t * cin, cin)] = slab
            return jnp.dot(col_ref[:, pl.ds(0, 9 * cin)], w_ref[...],
                           preferred_element_type=F32)

        gm_in = _gn_mask(Cin, groups)                          # built once, reused
        gm_out = _gn_mask(Cout, groups)

        xf = x_ref[0].astype(F32)                              # (S, Cin)

        # GroupNorm -> SiLU -> conv1 (+bias)
        h = _silu(_group_norm_rows(xf, g1[...], be1[...], gm_in, groups))
        h = conv3x3(h, Cin, w1) + b1[...]

        # + time-embedding projection (SiLU -> Linear), broadcast over pixels
        tv = _silu(t_ref[0].astype(F32))                       # (1, Tdim)
        h = h + jnp.dot(tv.astype(BF16), wt[...], preferred_element_type=F32) + bt[...]

        # GroupNorm -> SiLU -> conv2 (+bias)
        h = _silu(_group_norm_rows(h, g2[...], be2[...], gm_out, groups))
        h = conv3x3(h, Cout, w2) + b2[...]

        # + 1x1-conv residual of the layer input
        h = h + jnp.dot(xf.astype(BF16), wr[...], preferred_element_type=F32) + br[...]

        if attn:
            wqkv, bqkv, gg, gb = attn_refs
            # fused QKV projection: one (S, C) @ (C, 3C) bf16 MXU pass
            qkv = jnp.dot(h.astype(BF16), wqkv[...], preferred_element_type=F32) + bqkv[...]
            q = qkv[:, 0:Cout]
            k = qkv[:, Cout:2 * Cout]
            v = qkv[:, 2 * Cout:3 * Cout]

            def seq_softmax(a):                                # softmax over sequence axis
                m = jnp.max(a, axis=0, keepdims=True)
                e = jnp.exp(a - m)
                return e * pl.reciprocal(jnp.sum(e, axis=0, keepdims=True), approx=True)

            qs = seq_softmax(q)
            ks = seq_softmax(k)
            # KV = K^T V (no explicit transpose) with bf16 MXU operands
            kv = lax.dot_general(ks.astype(BF16), v.astype(BF16),
                                 dimension_numbers=(((0,), (0,)), ((), ())),
                                 preferred_element_type=F32)   # (C, C)
            z = jnp.dot(qs.astype(BF16), kv.astype(BF16), preferred_element_type=F32)
            gm_attn = gm_out if groups == 8 else _gn_mask(Cout, 8)
            h = _group_norm_rows(h + z, gg[...], gb[...], gm_attn, 8)

        o_ref[0] = h.astype(o_ref.dtype)

    if attn:
        def kernel(x_ref, t_ref, g1, be1, w1, b1, wt, bt, g2, be2, w2, b2, wr, br,
                   wqkv, bqkv, gg, gb, o_ref, pad_ref, col_ref):
            body(x_ref, t_ref, g1, be1, w1, b1, wt, bt, g2, be2, w2, b2, wr, br,
                 (wqkv, bqkv, gg, gb), o_ref, pad_ref, col_ref)
    else:
        def kernel(x_ref, t_ref, g1, be1, w1, b1, wt, bt, g2, be2, w2, b2, wr, br,
                   o_ref, pad_ref, col_ref):
            body(x_ref, t_ref, g1, be1, w1, b1, wt, bt, g2, be2, w2, b2, wr, br,
                 None, o_ref, pad_ref, col_ref)
    return kernel


# ----------------------------------------------------------------------------
# wrappers (one-time weight layout plumbing + pallas_call plumbing)
# ----------------------------------------------------------------------------
def upsample_pallas(x_nhwc, w_t, bias):
    """ConvTranspose2d(C, C, 4, stride=2, padding=1), NHWC in/out."""
    B, H, W, C = x_nhwc.shape
    S = H * W
    P = _pad_rows(W)
    xs = x_nhwc.reshape(B, S, C)

    # packed weight: (tap, ic, phase, oc) -> (9*C, 4*C); zeros for taps a phase
    # does not use.  One matmul then produces all four 2x2 output phases.
    w_pack = jnp.zeros((9, C, 4, C), F32)
    for t, (dy, dx) in enumerate(_TAPS):
        for r in range(2):
            ky = _PHASE_TAPS[r].get(dy)
            if ky is None:
                continue
            for s in range(2):
                kx = _PHASE_TAPS[s].get(dx)
                if kx is None:
                    continue
                w_pack = w_pack.at[t, :, 2 * r + s, :].set(w_t[:, :, ky, kx].astype(F32))
    w_pack = w_pack.reshape(9 * C, 4 * C).astype(BF16)
    b_pack = jnp.tile(bias.reshape(1, C).astype(F32), (1, 4))

    cost = pl.CostEstimate(flops=int(B * 2 * S * 9 * C * 4 * C), transcendentals=0,
                           bytes_accessed=int(4 * B * S * C * 5 + 2 * w_pack.size))
    out = pl.pallas_call(
        _make_upsample_kernel(S, W, C, P),
        out_shape=jax.ShapeDtypeStruct((B, S, 4 * C), x_nhwc.dtype),
        grid_spec=pltpu.PrefetchScalarGridSpec(
            num_scalar_prefetch=0,
            grid=(B,),
            in_specs=[pl.BlockSpec((1, S, C), lambda b: (b, 0, 0)),
                      _wspec((9 * C, 4 * C)),
                      _wspec((1, 4 * C))],
            out_specs=pl.BlockSpec((1, S, 4 * C), lambda b: (b, 0, 0)),
            scratch_shapes=[pltpu.VMEM((S + 2 * P, C), BF16),
                            pltpu.VMEM((S, 9 * C), BF16)],
        ),
        compiler_params=_cparams(),
        cost_estimate=cost,
    )(xs, w_pack, b_pack)

    # unpack phases (wrapper-side layout plumbing): (B, S, 4C) -> (B, 2H, 2W, C)
    ph = out.reshape(B, H, W, 2, 2, C)
    return jnp.transpose(ph, (0, 1, 3, 2, 4, 5)).reshape(B, 2 * H, 2 * W, C)


def upblock_layer_pallas(x_nhwc, t_emb, p, norm_channels, attn):
    """One fused UpBlock layer: ResNet block (+ optional LinearAttention)."""
    B, H, W, Cin = x_nhwc.shape
    S = H * W
    Cout = p["conv1_w"].shape[0]
    Cmax = max(Cin, Cout)
    Tdim = p["temb_w"].shape[1]
    P = _pad_rows(W)
    xs = x_nhwc.reshape(B, S, Cin)
    t3 = t_emb.reshape(B, 1, Tdim).astype(F32)

    # pre-transposed / packed bf16 weights (no in-kernel .T)
    w1 = jnp.transpose(p["conv1_w"], (2, 3, 1, 0)).reshape(9 * Cin, Cout).astype(BF16)
    w2 = jnp.transpose(p["conv2_w"], (2, 3, 1, 0)).reshape(9 * Cout, Cout).astype(BF16)
    wr = jnp.transpose(p["res_w"][:, :, 0, 0], (1, 0)).astype(BF16)
    wt = jnp.transpose(p["temb_w"], (1, 0)).astype(BF16)
    b1 = p["conv1_b"].reshape(1, Cout).astype(F32)
    b2 = p["conv2_b"].reshape(1, Cout).astype(F32)
    br = p["res_b"].reshape(1, Cout).astype(F32)
    bt = p["temb_b"].reshape(1, Cout).astype(F32)
    g1 = p["gn1_g"].reshape(1, Cin).astype(F32)
    be1 = p["gn1_b"].reshape(1, Cin).astype(F32)
    g2 = p["gn2_g"].reshape(1, Cout).astype(F32)
    be2 = p["gn2_b"].reshape(1, Cout).astype(F32)

    args = [xs, t3, g1, be1, w1, b1, wt, bt, g2, be2, w2, b2, wr, br]
    in_specs = [pl.BlockSpec((1, S, Cin), lambda b: (b, 0, 0)),
                pl.BlockSpec((1, 1, Tdim), lambda b: (b, 0, 0)),
                _wspec((1, Cin)), _wspec((1, Cin)),
                _wspec((9 * Cin, Cout)), _wspec((1, Cout)),
                _wspec((Tdim, Cout)), _wspec((1, Cout)),
                _wspec((1, Cout)), _wspec((1, Cout)),
                _wspec((9 * Cout, Cout)), _wspec((1, Cout)),
                _wspec((Cin, Cout)), _wspec((1, Cout))]

    flops = 2 * S * (9 * Cin * Cout + 9 * Cout * Cout + Cin * Cout) + 2 * Tdim * Cout
    trans = S * (Cin + 2 * Cout)
    wbytes = 2 * (w1.size + w2.size + wr.size + wt.size)
    if attn:
        a = p["attn"]
        wqkv = jnp.concatenate([jnp.transpose(a["q_w"]), jnp.transpose(a["k_w"]),
                                jnp.transpose(a["v_w"])], axis=1).astype(BF16)  # (C, 3C)
        bqkv = jnp.concatenate([a["q_b"], a["k_b"], a["v_b"]]).reshape(1, 3 * Cout).astype(F32)
        gg = a["gn_g"].reshape(1, Cout).astype(F32)
        gb = a["gn_b"].reshape(1, Cout).astype(F32)
        args += [wqkv, bqkv, gg, gb]
        in_specs += [_wspec((Cout, 3 * Cout)), _wspec((1, 3 * Cout)),
                     _wspec((1, Cout)), _wspec((1, Cout))]
        flops += 2 * S * Cout * 3 * Cout + 4 * S * Cout * Cout
        trans += 2 * S * Cout
        wbytes += 2 * wqkv.size

    cost = pl.CostEstimate(flops=int(B * flops), transcendentals=int(B * trans),
                           bytes_accessed=int(4 * B * S * (Cin + Cout) + wbytes))
    out = pl.pallas_call(
        _make_layer_kernel(S, W, Cin, Cout, Cmax, P, norm_channels, attn),
        out_shape=jax.ShapeDtypeStruct((B, S, Cout), x_nhwc.dtype),
        grid_spec=pltpu.PrefetchScalarGridSpec(
            num_scalar_prefetch=0,
            grid=(B,),
            in_specs=in_specs,
            out_specs=pl.BlockSpec((1, S, Cout), lambda b: (b, 0, 0)),
            # shared pad scratch (max width) + shared im2col scratch
            scratch_shapes=[pltpu.VMEM((S + 2 * P, Cmax), BF16),
                            pltpu.VMEM((S, 9 * Cmax), BF16)],
        ),
        compiler_params=_cparams(),
        cost_estimate=cost,
    )(*args)
    return out.reshape(B, H, W, Cout)


def upblock_forward(x_nchw, out_down, t_emb, params, cfg):
    """Pallas UpBlock forward.  num_heads is accepted for parity with the
    PyTorch module but (as in its LinearAttentionBlock) unused."""
    x = jnp.transpose(x_nchw, (0, 2, 3, 1))                    # NHWC (lane-dense C)
    if cfg["up_sample"]:
        x = upsample_pallas(x, params["up_w"], params["up_b"])
    if out_down is not None:
        # NOTE: the PyTorch module as written only type-checks with out_down=None
        # (the concat would change the channel count expected by layer 0).
        x = jnp.concatenate([x, jnp.transpose(out_down, (0, 2, 3, 1))], axis=-1)
    out = x
    for i in range(cfg["num_layers"]):
        out = upblock_layer_pallas(out, t_emb, params["layers"][i],
                                   cfg["norm_channels"], cfg["attn"])
    return jnp.transpose(out, (0, 3, 1, 2))                    # back to NCHW


# ----------------------------------------------------------------------------
# pure-JAX reference mirroring the PyTorch forward (eval mode; matmul operands
# cast to bf16 exactly like the kernels, everything else f32)
# ----------------------------------------------------------------------------
def _gn_ref(x, gamma, beta, groups, eps=1e-5):
    B, C = x.shape[0], x.shape[1]
    xg = x.reshape(B, groups, -1)
    mean = jnp.mean(xg, axis=-1, keepdims=True)
    var = jnp.mean(jnp.square(xg - mean), axis=-1, keepdims=True)
    xn = ((xg - mean) / jnp.sqrt(var + eps)).reshape(x.shape)
    shp = (1, C) + (1,) * (x.ndim - 2)
    return xn * gamma.reshape(shp) + beta.reshape(shp)


def _conv2d_ref(x, w, b, padding):
    y = lax.conv_general_dilated(x.astype(BF16), w.astype(BF16), window_strides=(1, 1),
                                 padding=((padding, padding), (padding, padding)),
                                 dimension_numbers=("NCHW", "OIHW", "NCHW"),
                                 preferred_element_type=F32)
    return y + b.reshape(1, -1, 1, 1)


def _conv_transpose_ref(x, w, b):
    w_flip = jnp.transpose(w, (1, 0, 2, 3))[:, :, ::-1, ::-1]
    y = lax.conv_general_dilated(x.astype(BF16), w_flip.astype(BF16), window_strides=(1, 1),
                                 padding=((2, 2), (2, 2)), lhs_dilation=(2, 2),
                                 dimension_numbers=("NCHW", "OIHW", "NCHW"),
                                 preferred_element_type=F32)
    return y + b.reshape(1, -1, 1, 1)


def _linear_attention_ref(x, p):
    B, C, H, W = x.shape
    xr = jnp.transpose(x.reshape(B, C, H * W), (0, 2, 1))      # (B, S, C)

    def proj(w, b):
        return jnp.einsum("bsc,oc->bso", xr.astype(BF16), w.astype(BF16),
                          preferred_element_type=F32) + b

    q = jax.nn.softmax(proj(p["q_w"], p["q_b"]), axis=1)
    k = jax.nn.softmax(proj(p["k_w"], p["k_b"]), axis=1)
    v = proj(p["v_w"], p["v_b"])
    kv = jnp.einsum("bsc,bsd->bcd", k.astype(BF16), v.astype(BF16),
                    preferred_element_type=F32)
    z = jnp.einsum("bsc,bcd->bsd", q.astype(BF16), kv.astype(BF16),
                   preferred_element_type=F32)
    yn = _gn_ref(jnp.transpose(xr + z, (0, 2, 1)), p["gn_g"], p["gn_b"], 8)   # (B, C, S)
    return yn.reshape(B, C, H, W)


def upblock_reference(x, out_down, t_emb, params, cfg):
    if cfg["up_sample"]:
        x = _conv_transpose_ref(x, params["up_w"], params["up_b"])
    if out_down is not None:
        x = jnp.concatenate([x, out_down], axis=1)
    out = x
    for i in range(cfg["num_layers"]):
        p = params["layers"][i]
        resnet_input = out
        h = jax.nn.silu(_gn_ref(out, p["gn1_g"], p["gn1_b"], cfg["norm_channels"]))
        h = _conv2d_ref(h, p["conv1_w"], p["conv1_b"], padding=1)
        tp = jnp.einsum("bt,ot->bo", jax.nn.silu(t_emb).astype(BF16),
                        p["temb_w"].astype(BF16), preferred_element_type=F32) + p["temb_b"]
        h = h + tp[:, :, None, None]
        h = jax.nn.silu(_gn_ref(h, p["gn2_g"], p["gn2_b"], cfg["norm_channels"]))
        h = _conv2d_ref(h, p["conv2_w"], p["conv2_b"], padding=1)
        out = h + _conv2d_ref(resnet_input, p["res_w"], p["res_b"], padding=0)
        if cfg["attn"]:
            out = _linear_attention_ref(out, p["attn"])
    return out


# ----------------------------------------------------------------------------
if __name__ == "__main__":
    cfg = dict(in_channels=16, out_channels=32, t_emb_dim=32, up_sample=True,
               num_heads=4, num_layers=2, attn=True, norm_channels=8)
    B, H0, W0 = 2, 8, 8
    Cin, Cout, Tdim = cfg["in_channels"], cfg["out_channels"], cfg["t_emb_dim"]

    keys = iter(jax.random.split(jax.random.PRNGKey(0), 64))

    def nrm(shape, scale=0.1):
        return scale * jax.random.normal(next(keys), shape, F32)

    x = jax.random.normal(next(keys), (B, Cin, H0, W0), F32)
    t_emb = jax.random.normal(next(keys), (B, Tdim), F32)

    params = {"up_w": nrm((Cin, Cin, 4, 4)), "up_b": nrm((Cin,), 0.05), "layers": []}
    for i in range(cfg["num_layers"]):
        cin_i = Cin if i == 0 else Cout
        params["layers"].append({
            "gn1_g": 1.0 + nrm((cin_i,), 0.05), "gn1_b": nrm((cin_i,), 0.05),
            "conv1_w": nrm((Cout, cin_i, 3, 3)), "conv1_b": nrm((Cout,), 0.05),
            "temb_w": nrm((Cout, Tdim)), "temb_b": nrm((Cout,), 0.05),
            "gn2_g": 1.0 + nrm((Cout,), 0.05), "gn2_b": nrm((Cout,), 0.05),
            "conv2_w": nrm((Cout, Cout, 3, 3)), "conv2_b": nrm((Cout,), 0.05),
            "res_w": nrm((Cout, cin_i, 1, 1)), "res_b": nrm((Cout,), 0.05),
            "attn": {
                "q_w": nrm((Cout, Cout)), "q_b": nrm((Cout,), 0.05),
                "k_w": nrm((Cout, Cout)), "k_b": nrm((Cout,), 0.05),
                "v_w": nrm((Cout, Cout)), "v_b": nrm((Cout,), 0.05),
                "gn_g": 1.0 + nrm((Cout,), 0.05), "gn_b": nrm((Cout,), 0.05),
            },
        })

    out = jax.block_until_ready(upblock_forward(x, None, t_emb, params, cfg))
    assert out.shape == (B, Cout, 2 * H0, 2 * W0), out.shape

    ref = jax.block_until_ready(upblock_reference(x, None, t_emb, params, cfg))
    max_diff = float(jnp.max(jnp.abs(out - ref)))
    assert jnp.allclose(out, ref, atol=2e-2, rtol=2e-2), f"mismatch vs reference, max|diff|={max_diff}"

    print("KERNEL_OK")
</pallas_src>

<mosaic_0001>
module attributes {stable_mosaic.version = 11 : i64} {
  func.func @kernel(%arg0: i32, %arg1: memref<1x64x16xf32, #tpu.memory_space<vmem>>, %arg2: memref<144x64xbf16, #tpu.memory_space<vmem>>, %arg3: memref<1x64xf32, #tpu.memory_space<vmem>>, %arg4: memref<1x64x64xf32, #tpu.memory_space<vmem>>, %arg5: memref<96x16xbf16, #tpu.memory_space<vmem>>, %arg6: memref<64x144xbf16, #tpu.memory_space<vmem>>) attributes {dimension_semantics = [#tpu.dimension_semantics<parallel>], iteration_bounds = array<i64: 2>, scalar_prefetch = 0 : i64, scratch_operands = 2 : i64, tpu.core_type = #tpu.core_type<tc>, window_params = [{transform_indices = @transform_0, window_bounds = array<i64: 1, 64, 16>}, {pipeline_mode = #tpu.pipeline_mode<synchronous>, transform_indices = @transform_1, window_bounds = array<i64: 144, 64>}, {pipeline_mode = #tpu.pipeline_mode<synchronous>, transform_indices = @transform_2, window_bounds = array<i64: 1, 64>}, {transform_indices = @transform_3, window_bounds = array<i64: 1, 64, 64>}]} {
    %cst = arith.constant 0.000000e+00 : bf16
    %0 = vector.broadcast %cst : bf16 to vector<16x16xbf16>
    %c0 = arith.constant 0 : index
    %c0_0 = arith.constant 0 : index
    %1 = vector.load %arg5[%c0, %c0_0] : memref<96x16xbf16, #tpu.memory_space<vmem>>, vector<16x16xbf16>
    tpu.vector_store %arg5[%c0, %c0_0], %0 {strides = array<i32>} : memref<96x16xbf16, #tpu.memory_space<vmem>>, vector<16x16xbf16>,
    %cst_1 = arith.constant 0.000000e+00 : bf16
    %2 = vector.broadcast %cst_1 : bf16 to vector<16x16xbf16>
    %c80 = arith.constant 80 : index
    %c0_2 = arith.constant 0 : index
    %3 = vector.load %arg5[%c80, %c0_2] : memref<96x16xbf16, #tpu.memory_space<vmem>>, vector<16x16xbf16>
    tpu.vector_store %arg5[%c80, %c0_2], %2 {strides = array<i32>} : memref<96x16xbf16, #tpu.memory_space<vmem>>, vector<16x16xbf16>,
    %c0_3 = arith.constant 0 : index
    %c0_4 = arith.constant 0 : index
    %c0_5 = arith.constant 0 : index
    %4 = vector.load %arg1[%c0_3, %c0_4, %c0_5] : memref<1x64x16xf32, #tpu.memory_space<vmem>>, vector<1x64x16xf32>
    %5 = vector.shape_cast %4 : vector<1x64x16xf32> to vector<64x16xf32>
    %6 = arith.truncf %5 : vector<64x16xf32> to vector<64x16xbf16>
    %c16 = arith.constant 16 : index
    %c0_6 = arith.constant 0 : index
    %7 = vector.load %arg5[%c16, %c0_6] : memref<96x16xbf16, #tpu.memory_space<vmem>>, vector<64x16xbf16>
    tpu.vector_store %arg5[%c16, %c0_6], %6 {strides = array<i32>} : memref<96x16xbf16, #tpu.memory_space<vmem>>, vector<64x16xbf16>,
    %8 = tpu.iota {dimensions = array<i32: 0>} : vector<64x1xi32>
    %c8_i32 = arith.constant 8 : i32
    %c0_i32 = arith.constant 0 : i32
    %9 = arith.cmpi eq, %c8_i32, %c0_i32 : i32
    %c1_i32 = arith.constant 1 : i32
    %10 = arith.select %9, %c1_i32, %c8_i32 : i32
    %11 = vector.broadcast %10 : i32 to vector<64x1xi32>
    %12 = arith.remsi %8, %11 : vector<64x1xi32>
    %c0_i32_7 = arith.constant 0 : i32
    %13 = vector.broadcast %c0_i32_7 : i32 to vector<64x1xi32>
    %14 = arith.cmpi ne, %12, %13 : vector<64x1xi32>
    %c0_i32_8 = arith.constant 0 : i32
    %15 = vector.broadcast %c0_i32_8 : i32 to vector<64x1xi32>
    %16 = arith.cmpi slt, %12, %15 : vector<64x1xi32>
    %c0_i32_9 = arith.constant 0 : i32
    %17 = arith.cmpi slt, %10, %c0_i32_9 : i32
    %18 = vector.broadcast %17 : i1 to vector<64x1xi1>
    %19 = vector.broadcast %18 : vector<64x1xi1> to vector<64x1xi1>
    %20 = arith.xori %16, %19 : vector<64x1xi1>
    %21 = arith.andi %20, %14 : vector<64x1xi1>
    %22 = vector.broadcast %10 : i32 to vector<64x1xi32>
    %23 = arith.addi %12, %22 : vector<64x1xi32>
    %24 = arith.select %21, %23, %12 : vector<64x1xi1>, vector<64x1xi32>
    %c1_i32_10 = arith.constant 1 : i32
    %25 = vector.broadcast %c1_i32_10 : i32 to vector<64x1xi32>
    %26 = arith.cmpi sge, %24, %25 : vector<64x1xi32>
    %27 = vector.shape_cast %26 : vector<64x1xi1> to vector<64x1xi1>
    %28 = vector.broadcast %27 : vector<64x1xi1> to vector<64x16xi1>
    %c6_i32 = arith.constant 6 : i32
    %29 = vector.broadcast %c6_i32 : i32 to vector<64x1xi32>
    %30 = arith.cmpi sle, %24, %29 : vector<64x1xi32>
    %31 = vector.shape_cast %30 : vector<64x1xi1> to vector<64x1xi1>
    %32 = vector.broadcast %31 : vector<64x1xi1> to vector<64x16xi1>
    %c7 = arith.constant 7 : index
    %c0_11 = arith.constant 0 : index
    %33 = vector.load %arg5[%c7, %c0_11] : memref<96x16xbf16, #tpu.memory_space<vmem>>, vector<64x16xbf16>
    %cst_12 = arith.constant 0.000000e+00 : bf16
    %34 = vector.broadcast %cst_12 : bf16 to vector<64x16xbf16>
    %35 = arith.select %28, %33, %34 : vector<64x16xi1>, vector<64x16xbf16>
    %c0_13 = arith.constant 0 : index
    %c0_14 = arith.constant 0 : index
    %36 = vector.load %arg6[%c0_13, %c0_14] : memref<64x144xbf16, #tpu.memory_space<vmem>>, vector<64x16xbf16>
    tpu.vector_store %arg6[%c0_13, %c0_14], %35 {strides = array<i32>} : memref<64x144xbf16, #tpu.memory_space<vmem>>, vector<64x16xbf16>,
    %c8 = arith.constant 8 : index
    %c0_15 = arith.constant 0 : index
    %37 = vector.load %arg5[%c8, %c0_15] : memref<96x16xbf16, #tpu.memory_space<vmem>>, vector<64x16xbf16>
    %c0_16 = arith.constant 0 : index
    %c16_17 = arith.constant 16 : index
    %38 = vector.load %arg6[%c0_16, %c16_17] : memref<64x144xbf16, #tpu.memory_space<vmem>>, vector<64x16xbf16>
    tpu.vector_store %arg6[%c0_16, %c16_17], %37 {strides = array<i32>} : memref<64x144xbf16, #tpu.memory_space<vmem>>, vector<64x16xbf16>,
    %c9 = arith.constant 9 : index
    %c0_18 = arith.constant 0 : index
    %39 = vector.load %arg5[%c9, %c0_18] : memref<96x16xbf16, #tpu.memory_space<vmem>>, vector<64x16xbf16>
    %cst_19 = arith.constant 0.000000e+00 : bf16
    %40 = vector.broadcast %cst_19 : bf16 to vector<64x16xbf16>
    %41 = arith.select %32, %39, %40 : vector<64x16xi1>, vector<64x16xbf16>
    %c0_20 = arith.constant 0 : index
    %c32 = arith.constant 32 : index
    %42 = vector.load %arg6[%c0_20, %c32] : memref<64x144xbf16, #tpu.memory_space<vmem>>, vector<64x16xbf16>
    tpu.vector_store %arg6[%c0_20, %c32], %41 {strides = array<i32>} : memref<64x144xbf16, #tpu.memory_space<vmem>>, vector<64x16xbf16>,
    %c15 = arith.constant 15 : index
    %c0_21 = arith.constant 0 : index
    %43 = vector.load %arg5[%c15, %c0_21] : memref<96x16xbf16, #tpu.memory_space<vmem>>, vector<64x16xbf16>
    %cst_22 = arith.constant 0.000000e+00 : bf16
    %44 = vector.broadcast %cst_22 : bf16 to vector<64x16xbf16>
    %45 = arith.select %28, %43, %44 : vector<64x16xi1>, vector<64x16xbf16>
    %c0_23 = arith.constant 0 : index
    %c48 = arith.constant 48 : index
    %46 = vector.load %arg6[%c0_23, %c48] : memref<64x144xbf16, #tpu.memory_space<vmem>>, vector<64x16xbf16>
    tpu.vector_store %arg6[%c0_23, %c48], %45 {strides = array<i32>} : memref<64x144xbf16, #tpu.memory_space<vmem>>, vector<64x16xbf16>,
    %c16_24 = arith.constant 16 : index
    %c0_25 = arith.constant 0 : index
    %47 = vector.load %arg5[%c16_24, %c0_25] : memref<96x16xbf16, #tpu.memory_space<vmem>>, vector<64x16xbf16>
    %c0_26 = arith.constant 0 : index
    %c64 = arith.constant 64 : index
    %48 = vector.load %arg6[%c0_26, %c64] : memref<64x144xbf16, #tpu.memory_space<vmem>>, vector<64x16xbf16>
    tpu.vector_store %arg6[%c0_26, %c64], %47 {strides = array<i32>} : memref<64x144xbf16, #tpu.memory_space<vmem>>, vector<64x16xbf16>,
    %c17 = arith.constant 17 : index
    %c0_27 = arith.constant 0 : index
    %49 = vector.load %arg5[%c17, %c0_27] : memref<96x16xbf16, #tpu.memory_space<vmem>>, vector<64x16xbf16>
    %cst_28 = arith.constant 0.000000e+00 : bf16
    %50 = vector.broadcast %cst_28 : bf16 to vector<64x16xbf16>
    %51 = arith.select %32, %49, %50 : vector<64x16xi1>, vector<64x16xbf16>
    %c0_29 = arith.constant 0 : index
    %c80_30 = arith.constant 80 : index
    %52 = vector.load %arg6[%c0_29, %c80_30] : memref<64x144xbf16, #tpu.memory_space<vmem>>, vector<64x16xbf16>
    tpu.vector_store %arg6[%c0_29, %c80_30], %51 {strides = array<i32>} : memref<64x144xbf16, #tpu.memory_space<vmem>>, vector<64x16xbf16>,
    %c23 = arith.constant 23 : index
    %c0_31 = arith.constant 0 : index
    %53 = vector.load %arg5[%c23, %c0_31] : memref<96x16xbf16, #tpu.memory_space<vmem>>, vector<64x16xbf16>
    %cst_32 = arith.constant 0.000000e+00 : bf16
    %54 = vector.broadcast %cst_32 : bf16 to vector<64x16xbf16>
    %55 = arith.select %28, %53, %54 : vector<64x16xi1>, vector<64x16xbf16>
    %c0_33 = arith.constant 0 : index
    %c96 = arith.constant 96 : index
    %56 = vector.load %arg6[%c0_33, %c96] : memref<64x144xbf16, #tpu.memory_space<vmem>>, vector<64x16xbf16>
    tpu.vector_store %arg6[%c0_33, %c96], %55 {strides = array<i32>} : memref<64x144xbf16, #tpu.memory_space<vmem>>, vector<64x16xbf16>,
    %c24 = arith.constant 24 : index
    %c0_34 = arith.constant 0 : index
    %57 = vector.load %arg5[%c24, %c0_34] : memref<96x16xbf16, #tpu.memory_space<vmem>>, vector<64x16xbf16>
    %c0_35 = arith.constant 0 : index
    %c112 = arith.constant 112 : index
    %58 = vector.load %arg6[%c0_35, %c112] : memref<64x144xbf16, #tpu.memory_space<vmem>>, vector<64x16xbf16>
    tpu.vector_store %arg6[%c0_35, %c112], %57 {strides = array<i32>} : memref<64x144xbf16, #tpu.memory_space<vmem>>, vector<64x16xbf16>,
    %c25 = arith.constant 25 : index
    %c0_36 = arith.constant 0 : index
    %59 = vector.load %arg5[%c25, %c0_36] : memref<96x16xbf16, #tpu.memory_space<vmem>>, vector<64x16xbf16>
    %cst_37 = arith.constant 0.000000e+00 : bf16
    %60 = vector.broadcast %cst_37 : bf16 to vector<64x16xbf16>
    %61 = arith.select %32, %59, %60 : vector<64x16xi1>, vector<64x16xbf16>
    %c0_38 = arith.constant 0 : index
    %c128 = arith.constant 128 : index
    %62 = vector.load %arg6[%c0_38, %c128] : memref<64x144xbf16, #tpu.memory_space<vmem>>, vector<64x16xbf16>
    tpu.vector_store %arg6[%c0_38, %c128], %61 {strides = array<i32>} : memref<64x144xbf16, #tpu.memory_space<vmem>>, vector<64x16xbf16>,
    %c0_39 = arith.constant 0 : index
    %c0_40 = arith.constant 0 : index
    %63 = vector.load %arg6[%c0_39, %c0_40] : memref<64x144xbf16, #tpu.memory_space<vmem>>, vector<64x144xbf16>
    %c0_41 = arith.constant 0 : index
    %c0_42 = arith.constant 0 : index
    %64 = vector.load %arg2[%c0_41, %c0_42] : memref<144x64xbf16, #tpu.memory_space<vmem>>, vector<144x64xbf16>
    %cst_43 = arith.constant dense<0.000000e+00> : vector<64x64xf32>
    %65 = tpu.matmul %63, %64, %cst_43 {dimension_numbers = #tpu.dot_dimension_numbers<[1], [0], [0], [1], [0, 0, 1, 1], [], []>} : vector<64x144xbf16>, vector<144x64xbf16>, vector<64x64xf32> -> vector<64x64xf32>
    %c0_44 = arith.constant 0 : index
    %c0_45 = arith.constant 0 : index
    %66 = vector.load %arg3[%c0_44, %c0_45] : memref<1x64xf32, #tpu.memory_space<vmem>>, vector<1x64xf32>
    %67 = vector.broadcast %66 : vector<1x64xf32> to vector<64x64xf32>
    %68 = arith.addf %65, %67 : vector<64x64xf32>
    %c0_46 = arith.constant 0 : index
    %c0_47 = arith.constant 0 : index
    %c0_48 = arith.constant 0 : index
    %69 = vector.load %arg4[%c0_46, %c0_47, %c0_48] : memref<1x64x64xf32, #tpu.memory_space<vmem>>, vector<1x64x64xf32>
    %70 = vector.shape_cast %69 : vector<1x64x64xf32> to vector<64x64xf32>
    %71 = vector.shape_cast %68 : vector<64x64xf32> to vector<1x64x64xf32>
    tpu.vector_store %arg4[%c0_46, %c0_47, %c0_48], %71 {strides = array<i32>} : memref<1x64x64xf32, #tpu.memory_space<vmem>>, vector<1x64x64xf32>,
    return
  }
  func.func @transform_0(%arg0: i32) -> (i32, i32, i32) {
    %c0_i32 = arith.constant 0 : i32
    %c0_i32_0 = arith.constant 0 : i32
    %c0_i32_1 = arith.constant 0 : i32
    return %arg0, %c0_i32, %c0_i32_0 : i32, i32, i32
  }
  func.func @transform_1(%arg0: i32) -> (i32, i32) {
    %c0_i32 = arith.constant 0 : i32
    %c0_i32_0 = arith.constant 0 : i32
    %c0_i32_1 = arith.constant 0 : i32
    return %c0_i32, %c0_i32_0 : i32, i32
  }
  func.func @transform_2(%arg0: i32) -> (i32, i32) {
    %c0_i32 = arith.constant 0 : i32
    %c0_i32_0 = arith.constant 0 : i32
    %c0_i32_1 = arith.constant 0 : i32
    return %c0_i32, %c0_i32_0 : i32, i32
  }
  func.func @transform_3(%arg0: i32) -> (i32, i32, i32) {
    %c0_i32 = arith.constant 0 : i32
    %c0_i32_0 = arith.constant 0 : i32
    %c0_i32_1 = arith.constant 0 : i32
    return %arg0, %c0_i32, %c0_i32_0 : i32, i32, i32
  }
}

</mosaic_0001>

<llo_original>
// kernel: tpu_custom_call.1
$region0: #{tpu_custom_call.1}
  #allocation0 [shape = 'u32[]', space=smem, size = 0x4, offset = 0x4, fixed_abs, tag = 'smem constant byte address 0x4 - core index']
  #allocation1 [shape = 'u32[72,128]{1,0:T(1,128)}', space=vmem, size = 0x9000, scoped, tag = 'internal scratch']
  #allocation2 [shape = 'bf16[96,16]{1,0:T(8,128)(2,1)}', space=vmem, size = 0x6000, scoped, tag = 'scratch operand']
  #allocation3 [shape = 'bf16[64,144]{1,0:T(8,128)(2,1)}', space=vmem, size = 0x8000, scoped, tag = 'scratch operand']
  %s0 = inlined_call_operand.vmem [shape: f32[2,64,16], index: 0, kind: input, shape index: {}]
  %s1 = inlined_call_operand.vmem [shape: bf16[144,64], index: 1, kind: input, shape index: {}]
  %s2 = inlined_call_operand.vmem [shape: f32[1,64], index: 2, kind: input, shape index: {}]
  %s3 = inlined_call_operand.hbm [shape: f32[2,64,64], index: 3, kind: output, shape index: {}]
  %s4 = sld [smem:[#allocation0]]
  $region45: #{tpu_custom_call.1} parent=0
    _
  %s6 = ssub.s32 1, %s4
  %s7 = scalar_select 0, %s6, %s4
  $region1: #{tpu_custom_call.1} parent=0
    #allocation4 [shape = 'u8[65536]{0}', space=vmem, size = 0x10000, scoped, tag = 'output window, operand 0']
    #allocation5 [shape = 's32[2]{0}', space=sflag, size = 0x8, scoped, tag = 'scoped memory for tpu_custom_call.1']
    %8 = vsyncpa [#allocation5], 0
    %s9 = scalar_lea.sflag [#allocation5], 1
    %10 = vsyncpa %s9, 0
    loop: start=0, step=1, limit=4
    $region2: #{tpu_custom_call.1} parent=1 // loop_pre_header
      _
    $region3: #{tpu_custom_call.1} parent=1 // loop_header
      %s12 = sphi 0, %s16
      %p13 = scmp.ge.s32.totalorder %s12, 4
      %s22 = sphi 0, %s24
      %s25 = sphi 0, %s22
      %s26 = sphi 0, %s25
      %s42 = sphi 0, %s26
      %s46 = sphi 0, %s46
      %s48 = sphi 0, %s46
      %s49 = sphi 0, %s48
      %s63 = sphi 0, %s49
      %s67 = sphi 0, %s67
      %s69 = sphi 0, %s67
      %s70 = sphi 0, %s69
      %s84 = sphi 0, %s70
      %s90 = sphi 0, %s92
      %s93 = sphi 0, %s90
      %s94 = sphi 0, %s93
      %s110 = sphi 0, %s94
    $region4: #{tpu_custom_call.1} parent=1 // loop_header_branch
      %15 = sbr.rel (%p13) target = $region8
    $region5: #{tpu_custom_call.1} parent=1 // loop_body
      %s17 = ssub.s32 %s12, 1
      %s18 = ssub.s32 %s12, 2
      %s19 = sadd.s32 %s12, 1
      %s20 = ssub.s32 %s12, %s19
      %p21 = scmp.eq.s32.totalorder %s20, 0
      %s23 = sadd.s32 %s22, 1
      %s24 = scalar_select %p21, %s22, %s23
      %p27 = pneg %p21
      %p28 = scmp.eq.s32.totalorder %s12, 1
      %p29 = por %p27, %p28
      %p30 = scmp.ne.s32.totalorder %s22, %s25
      %p31 = scmp.eq.s32.totalorder %s12, 0
      %p32 = por %p30, %p31
      %p33 = scmp.ne.s32.totalorder %s22, %s25
      %p34 = scmp.eq.s32.totalorder %s17, 1
      %p35 = por %p33, %p34
      %p36 = scmp.ne.s32.totalorder %s25, %s26
      %p37 = scmp.eq.s32.totalorder %s17, 0
      %p38 = por %p36, %p37
      %p39 = scmp.ne.s32.totalorder %s25, %s26
      %p40 = scmp.eq.s32.totalorder %s18, 1
      %p41 = por %p39, %p40
      %p43 = scmp.ne.s32.totalorder %s26, %s42
      %p44 = scmp.eq.s32.totalorder %s18, 0
      %p45 = por %p43, %p44
      %s47 = sadd.s32 %s46, 1
      %p50 = scmp.eq.s32.totalorder %s12, 1
      %p51 = scmp.ne.s32.totalorder %s46, %s48
      %p52 = scmp.eq.s32.totalorder %s12, 0
      %p53 = por %p51, %p52
      %p54 = scmp.ne.s32.totalorder %s46, %s48
      %p55 = scmp.eq.s32.totalorder %s17, 1
      %p56 = por %p54, %p55
      %p57 = scmp.ne.s32.totalorder %s48, %s49
      %p58 = scmp.eq.s32.totalorder %s17, 0
      %p59 = por %p57, %p58
      %p60 = scmp.ne.s32.totalorder %s48, %s49
      %p61 = scmp.eq.s32.totalorder %s18, 1
      %p62 = por %p60, %p61
      %p64 = scmp.ne.s32.totalorder %s49, %s63
      %p65 = scmp.eq.s32.totalorder %s18, 0
      %p66 = por %p64, %p65
      %s68 = sadd.s32 %s67, 1
      %p71 = scmp.eq.s32.totalorder %s12, 1
      %p72 = scmp.ne.s32.totalorder %s67, %s69
      %p73 = scmp.eq.s32.totalorder %s12, 0
      %p74 = por %p72, %p73
      %p75 = scmp.ne.s32.totalorder %s67, %s69
      %p76 = scmp.eq.s32.totalorder %s17, 1
      %p77 = por %p75, %p76
      %p78 = scmp.ne.s32.totalorder %s69, %s70
      %p79 = scmp.eq.s32.totalorder %s17, 0
      %p80 = por %p78, %p79
      %p81 = scmp.ne.s32.totalorder %s69, %s70
      %p82 = scmp.eq.s32.totalorder %s18, 1
      %p83 = por %p81, %p82
      %p85 = scmp.ne.s32.totalorder %s70, %s84
      %p86 = scmp.eq.s32.totalorder %s18, 0
      %p87 = por %p85, %p86
      %s88 = ssub.s32 %s12, %s19
      %p89 = scmp.eq.s32.totalorder %s88, 0
      %s91 = sadd.s32 %s90, 1
      %s92 = scalar_select %p89, %s90, %s91
      %p95 = pneg %p89
      %p96 = scmp.eq.s32.totalorder %s12, 1
      %p97 = por %p95, %p96
      %p98 = scmp.ne.s32.totalorder %s90, %s93
      %p99 = scmp.eq.s32.totalorder %s12, 0
      %p100 = por %p98, %p99
      %p101 = scmp.ne.s32.totalorder %s90, %s93
      %p102 = scmp.eq.s32.totalorder %s17, 1
      %p103 = por %p101, %p102
      %p104 = scmp.ne.s32.totalorder %s93, %s94
      %p105 = scmp.eq.s32.totalorder %s17, 0
      %p106 = por %p104, %p105
      %p107 = scmp.ne.s32.totalorder %s93, %s94
      %p108 = scmp.eq.s32.totalorder %s18, 1
      %p109 = por %p107, %p108
      %p111 = scmp.ne.s32.totalorder %s94, %s110
      %p112 = scmp.eq.s32.totalorder %s18, 0
      %p113 = por %p111, %p112
      %p114 = scmp.le.s32.totalorder 1, %s12
      %p115 = scmp.lt.s32.totalorder %s12, 3
      %p116 = pnand %p114, %p115
      %p117 = pneg %p116
      // Predicated region
      $region9: #{tpu_custom_call.1} parent=5 // pred_check
        _
      $region10: #{tpu_custom_call.1} parent=5 // pred_check_branch
        %119 = sbr.rel (%p116) target = $region12
      $region11: #{tpu_custom_call.1} parent=5 // pred_region
        %s120 = ssub.s32 %s12, 1
        // Predicated region
        $region13: #{tpu_custom_call.1} parent=11 // pred_check
          %p121 = pneg %p59
        $region14: #{tpu_custom_call.1} parent=11 // pred_check_branch
          %123 = sbr.rel (%p121) target = $region16
        $region15: #{tpu_custom_call.1} parent=11 // pred_region
          _
        $region16: #{tpu_custom_call.1} parent=11 // pred_fallthru
          _
        // Predicated region
        $region17: #{tpu_custom_call.1} parent=11 // pred_check
          %p124 = pneg %p80
        $region18: #{tpu_custom_call.1} parent=11 // pred_check_branch
          %126 = sbr.rel (%p124) target = $region20
        $region19: #{tpu_custom_call.1} parent=11 // pred_region
          _
        $region20: #{tpu_custom_call.1} parent=11 // pred_fallthru
          _
      $region12: #{tpu_custom_call.1} parent=5 // pred_fallthru
        _
      %p127 = scmp.lt.s32.totalorder %s12, 2
      // Predicated region
      $region21: #{tpu_custom_call.1} parent=5 // pred_check
        %p128 = pneg %p127
      $region22: #{tpu_custom_call.1} parent=5 // pred_check_branch
        %130 = sbr.rel (%p128) target = $region24
      $region23: #{tpu_custom_call.1} parent=5 // pred_region
        // Predicated region
        $region25: #{tpu_custom_call.1} parent=23 // pred_check
          %p131 = pneg %p32
        $region26: #{tpu_custom_call.1} parent=23 // pred_check_branch
          %133 = sbr.rel (%p131) target = $region28
        $region27: #{tpu_custom_call.1} parent=23 // pred_region
          %p134 = scmp.lt.s32.totalorder %s12, 1
          %s135 = scalar_select %p134, %s12, 1
          %s136 = smul.addr %s135, 8
          %s137 = smul.addr %s136, 8
          %s138 = scalar_lea.vmem %s0, %s137
        $region28: #{tpu_custom_call.1} parent=23 // pred_fallthru
          _
      $region24: #{tpu_custom_call.1} parent=5 // pred_fallthru
        _
      %p139 = scmp.le.s32.totalorder 1, %s12
      %p140 = scmp.lt.s32.totalorder %s12, 3
      %p141 = pnand %p139, %p140
      %p142 = pneg %p141
      // Predicated region
      $region29: #{tpu_custom_call.1} parent=5 // pred_check
        _
      $region30: #{tpu_custom_call.1} parent=5 // pred_check_branch
        %144 = sbr.rel (%p141) target = $region32
      $region31: #{tpu_custom_call.1} parent=5 // pred_region
        %s145 = ssub.s32 %s12, 1
        %p146 = scmp.lt.s32.totalorder %s17, 1
        %s147 = scalar_select %p146, %s17, 1
        %s148 = smul.addr %s147, 8
        %s149 = smul.addr %s148, 8
        %s150 = scalar_lea.vmem %s0, %s149
        %p151 = pneg %p38
        %p152 = pneg %p35
        %p153 = pneg %p59
        %p154 = pneg %p56
        %p155 = pneg %p80
        %p156 = pneg %p77
        %p157 = pneg %p106
        %p158 = pneg %p103
        %s159 = sand.u32 %s93, 1
        %s160 = scalar_lea.sflag [#allocation5], %s159
        %s161 = sand.u32 %s93, 1
        %s162 = smul.addr %s161, 64
        %s163 = scalar_lea.vmem [#allocation4], %s162
        %p164 = scmp.lt.s32.totalorder %s17, 1
        %s165 = scalar_select %p164, %s17, 1
        %s166 = smul.addr %s165, 8
        %s167 = smul.addr %s166, 8
        %s168 = scalar_lea.vmem %s0, %s167
        %vm172 = vcmask 125952
        %173 = vst.msk [vmem:[#allocation2] sm:$0xf] %vm172, 0
        %174 = vst.msk [vmem:[#allocation2 + $0x4] sm:$0xf] %vm172, 0
        %175 = vst.msk [vmem:[#allocation2 + $0x28] sm:$0xf] %vm172, 0
        %176 = vst.msk [vmem:[#allocation2 + $0x2c] sm:$0xf] %vm172, 0
        %v177 = vld [vmem:[%s168] sm:$0xff]
        %v178 = vld [vmem:[%s168 + $0x8] sm:$0xff]
        %v179 = vld [vmem:[%s168 + $0x10] sm:$0xff]
        %v180 = vld [vmem:[%s168 + $0x18] sm:$0xff]
        %v181 = vld [vmem:[%s168 + $0x20] sm:$0xff]
        %v182 = vld [vmem:[%s168 + $0x28] sm:$0xff]
        %v183 = vld [vmem:[%s168 + $0x30] sm:$0xff]
        %v184 = vld [vmem:[%s168 + $0x38] sm:$0xff]
        %v185 = vpack.c.bf16 %v177, %v177
        %v186 = vpack.c.bf16 %v178, %v178
        %v187 = vpack.c.bf16 %v179, %v179
        %v188 = vpack.c.bf16 %v180, %v180
        %v189 = vpack.c.bf16 %v181, %v181
        %v190 = vpack.c.bf16 %v182, %v182
        %v191 = vpack.c.bf16 %v183, %v183
        %v192 = vpack.c.bf16 %v184, %v184
        %193 = vst.msk [vmem:[#allocation2 + $0x8] sm:$0xf] %vm172, %v185
        %194 = vst.msk [vmem:[#allocation2 + $0xc] sm:$0xf] %vm172, %v186
        %195 = vst.msk [vmem:[#allocation2 + $0x10] sm:$0xf] %vm172, %v187
        %196 = vst.msk [vmem:[#allocation2 + $0x14] sm:$0xf] %vm172, %v188
        %197 = vst.msk [vmem:[#allocation2 + $0x18] sm:$0xf] %vm172, %v189
        %198 = vst.msk [vmem:[#allocation2 + $0x1c] sm:$0xf] %vm172, %v190
        %199 = vst.msk [vmem:[#allocation2 + $0x20] sm:$0xf] %vm172, %v191
        %200 = vst.msk [vmem:[#allocation2 + $0x24] sm:$0xf] %vm172, %v192
        %v201 = vlaneseq
        %v202 = vshrl.u32 %v201, 7
        %v203 = vadd.s32 %v202, 8
        %v204 = vadd.s32 %v202, 16
        %v205 = vadd.s32 %v202, 24
        %v206 = vadd.s32 %v202, 32
        %v207 = vadd.s32 %v202, 40
        %v208 = vadd.s32 %v202, 48
        %v209 = vadd.s32 %v202, 56
        %vm210 = vcmp.lt.s32.totalorder %v202, 0
        %v211 = vsub.s32 0, %v202
        %v212 = vsel %vm210, %v211, %v202
        %v213 = vshrl.u32 %v212, 3
        %v214 = vand.u32 %v212, 7
        %v215 = vsub.s32 0, %v214
        %v216 = vsel %vm210, %v215, %v214
        %vm217 = vcmp.lt.s32.totalorder %v203, 0
        %v218 = vsub.s32 0, %v203
        %v219 = vsel %vm217, %v218, %v203
        %v220 = vshrl.u32 %v219, 3
        %v221 = vand.u32 %v219, 7
        %v222 = vsub.s32 0, %v221
        %v223 = vsel %vm217, %v222, %v221
        %vm224 = vcmp.lt.s32.totalorder %v204, 0
        %v225 = vsub.s32 0, %v204
        %v226 = vsel %vm224, %v225, %v204
        %v227 = vshrl.u32 %v226, 3
        %v228 = vand.u32 %v226, 7
        %v229 = vsub.s32 0, %v228
        %v230 = vsel %vm224, %v229, %v228
        %vm231 = vcmp.lt.s32.totalorder %v205, 0
        %v232 = vsub.s32 0, %v205
        %v233 = vsel %vm231, %v232, %v205
        %v234 = vshrl.u32 %v233, 3
        %v235 = vand.u32 %v233, 7
        %v236 = vsub.s32 0, %v235
        %v237 = vsel %vm231, %v236, %v235
        %vm238 = vcmp.lt.s32.totalorder %v206, 0
        %v239 = vsub.s32 0, %v206
        %v240 = vsel %vm238, %v239, %v206
        %v241 = vshrl.u32 %v240, 3
        %v242 = vand.u32 %v240, 7
        %v243 = vsub.s32 0, %v242
        %v244 = vsel %vm238, %v243, %v242
        %vm245 = vcmp.lt.s32.totalorder %v207, 0
        %v246 = vsub.s32 0, %v207
        %v247 = vsel %vm245, %v246, %v207
        %v248 = vshrl.u32 %v247, 3
        %v249 = vand.u32 %v247, 7
        %v250 = vsub.s32 0, %v249
        %v251 = vsel %vm245, %v250, %v249
        %vm252 = vcmp.lt.s32.totalorder %v208, 0
        %v253 = vsub.s32 0, %v208
        %v254 = vsel %vm252, %v253, %v208
        %v255 = vshrl.u32 %v254, 3
        %v256 = vand.u32 %v254, 7
        %v257 = vsub.s32 0, %v256
        %v258 = vsel %vm252, %v257, %v256
        %vm259 = vcmp.lt.s32.totalorder %v209, 0
        %v260 = vsub.s32 0, %v209
        %v261 = vsel %vm259, %v260, %v209
        %v262 = vshrl.u32 %v261, 3
        %v263 = vand.u32 %v261, 7
        %v264 = vsub.s32 0, %v263
        %v265 = vsel %vm259, %v264, %v263
        %vm266 = vcmp.ne.s32.totalorder %v216, 0
        %vm267 = vcmp.ne.s32.totalorder %v223, 0
        %vm268 = vcmp.ne.s32.totalorder %v230, 0
        %vm269 = vcmp.ne.s32.totalorder %v237, 0
        %vm270 = vcmp.ne.s32.totalorder %v244, 0
        %vm271 = vcmp.ne.s32.totalorder %v251, 0
        %vm272 = vcmp.ne.s32.totalorder %v258, 0
        %vm273 = vcmp.ne.s32.totalorder %v265, 0
        %vm274 = vcmp.lt.s32.totalorder %v216, 0
        %vm275 = vcmp.lt.s32.totalorder %v223, 0
        %vm276 = vcmp.lt.s32.totalorder %v230, 0
        %vm277 = vcmp.lt.s32.totalorder %v237, 0
        %vm278 = vcmp.lt.s32.totalorder %v244, 0
        %vm279 = vcmp.lt.s32.totalorder %v251, 0
        %vm280 = vcmp.lt.s32.totalorder %v258, 0
        %vm281 = vcmp.lt.s32.totalorder %v265, 0
        %vm282 = vmand %vm274, %vm266
        %vm283 = vmand %vm275, %vm267
        %vm284 = vmand %vm276, %vm268
        %vm285 = vmand %vm277, %vm269
        %vm286 = vmand %vm278, %vm270
        %vm287 = vmand %vm279, %vm271
        %vm288 = vmand %vm280, %vm272
        %vm289 = vmand %vm281, %vm273
        %v290 = vadd.s32 %v216, 8
        %v291 = vadd.s32 %v223, 8
        %v292 = vadd.s32 %v230, 8
        %v293 = vadd.s32 %v237, 8
        %v294 = vadd.s32 %v244, 8
        %v295 = vadd.s32 %v251, 8
        %v296 = vadd.s32 %v258, 8
        %v297 = vadd.s32 %v265, 8
        %v298 = vsel %vm282, %v290, %v216
        %v299 = vsel %vm283, %v291, %v223
        %v300 = vsel %vm284, %v292, %v230
        %v301 = vsel %vm285, %v293, %v237
        %v302 = vsel %vm286, %v294, %v244
        %v303 = vsel %vm287, %v295, %v251
        %v304 = vsel %vm288, %v296, %v258
        %v305 = vsel %vm289, %v297, %v265
        %vm306 = vcmp.ge.s32.totalorder %v298, 1
        %vm307 = vcmp.ge.s32.totalorder %v299, 1
        %vm308 = vcmp.ge.s32.totalorder %v300, 1
        %vm309 = vcmp.ge.s32.totalorder %v301, 1
        %vm310 = vcmp.ge.s32.totalorder %v302, 1
        %vm311 = vcmp.ge.s32.totalorder %v303, 1
        %vm312 = vcmp.ge.s32.totalorder %v304, 1
        %vm313 = vcmp.ge.s32.totalorder %v305, 1
        %v314 = vsel %vm306, 1, 0
        %v315 = vsel %vm307, 1, 0
        %v316 = vsel %vm308, 1, 0
        %v317 = vsel %vm309, 1, 0
        %v318 = vsel %vm310, 1, 0
        %v319 = vsel %vm311, 1, 0
        %v320 = vsel %vm312, 1, 0
        %v321 = vsel %vm313, 1, 0
        %vm322 = vcmp.eq.s32.totalorder %v314, 1
        %vm323 = vcmp.eq.s32.totalorder %v315, 1
        %vm324 = vcmp.eq.s32.totalorder %v316, 1
        %vm325 = vcmp.eq.s32.totalorder %v317, 1
        %vm326 = vcmp.eq.s32.totalorder %v318, 1
        %vm327 = vcmp.eq.s32.totalorder %v319, 1
        %vm328 = vcmp.eq.s32.totalorder %v320, 1
        %vm329 = vcmp.eq.s32.totalorder %v321, 1
        %vm330 = vcmp.le.s32.totalorder %v298, 6
        %vm331 = vcmp.le.s32.totalorder %v299, 6
        %vm332 = vcmp.le.s32.totalorder %v300, 6
        %vm333 = vcmp.le.s32.totalorder %v301, 6
        %vm334 = vcmp.le.s32.totalorder %v302, 6
        %vm335 = vcmp.le.s32.totalorder %v303, 6
        %vm336 = vcmp.le.s32.totalorder %v304, 6
        %vm337 = vcmp.le.s32.totalorder %v305, 6
        %v338 = vsel %vm330, 1, 0
        %v339 = vsel %vm331, 1, 0
        %v340 = vsel %vm332, 1, 0
        %v341 = vsel %vm333, 1, 0
        %v342 = vsel %vm334, 1, 0
        %v343 = vsel %vm335, 1, 0
        %v344 = vsel %vm336, 1, 0
        %v345 = vsel %vm337, 1, 0
        %vm346 = vcmp.eq.s32.totalorder %v338, 1
        %vm347 = vcmp.eq.s32.totalorder %v339, 1
        %vm348 = vcmp.eq.s32.totalorder %v340, 1
        %vm349 = vcmp.eq.s32.totalorder %v341, 1
        %vm350 = vcmp.eq.s32.totalorder %v342, 1
        %vm351 = vcmp.eq.s32.totalorder %v343, 1
        %vm352 = vcmp.eq.s32.totalorder %v344, 1
        %vm353 = vcmp.eq.s32.totalorder %v345, 1
        %v354 = vld [vmem:[#allocation2] sm:$0x8]
        %v355 = vld [vmem:[#allocation2 + $0x4] sm:$0xf]
        %v356 = vld [vmem:[#allocation2 + $0x8] sm:$0xf]
        %v357 = vld [vmem:[#allocation2 + $0xc] sm:$0xf]
        %v358 = vld [vmem:[#allocation2 + $0x10] sm:$0xf]
        %v359 = vld [vmem:[#allocation2 + $0x14] sm:$0xf]
        %v360 = vld [vmem:[#allocation2 + $0x18] sm:$0xf]
        %v361 = vld [vmem:[#allocation2 + $0x1c] sm:$0xf]
        %v362 = vld [vmem:[#allocation2 + $0x20] sm:$0xf]
        %vm363 = vmpackc.low %vm322, %vm322
        %vm364 = vmpackc.low %vm323, %vm323
        %vm365 = vmpackc.low %vm324, %vm324
        %vm366 = vmpackc.low %vm325, %vm325
        %vm367 = vmpackc.low %vm326, %vm326
        %vm368 = vmpackc.low %vm327, %vm327
        %vm369 = vmpackc.low %vm328, %vm328
        %vm370 = vmpackc.low %vm329, %vm329
        %v371 = vsel %vm363, 65537, 0
        %v372 = vsel %vm364, 65537, 0
        %v373 = vsel %vm365, 65537, 0
        %v374 = vsel %vm366, 65537, 0
        %v375 = vsel %vm367, 65537, 0
        %v376 = vsel %vm368, 65537, 0
        %v377 = vsel %vm369, 65537, 0
        %v378 = vsel %vm370, 65537, 0
        %vm379 = vsmask.f32 3328
        %vm380 = vsmask.f32 7440
        %vm381 = vmor %vm379, %vm380
        %v383 = vshll.u32 %v371, 16
        %v385 = vrot.slane %v383, 5
        %v386 = vshrl.u32 %v371, 16
        %v388 = vrot.slane %v386, 4
        %v389 = vor.u32 %v388, %v385
        %v390 = vrot.slane %v389, 4
        %v392 = vshll.u32 %v372, 16
        %v394 = vrot.slane %v392, 5
        %v395 = vsel %vm381, %v390, %v394
        %v396 = vshrl.u32 %v372, 16
        %v398 = vrot.slane %v396, 4
        %v399 = vor.u32 %v398, %v394
        %v400 = vrot.slane %v399, 4
        %v402 = vshll.u32 %v373, 16
        %v404 = vrot.slane %v402, 5
        %v405 = vsel %vm381, %v400, %v404
        %v406 = vshrl.u32 %v373, 16
        %v408 = vrot.slane %v406, 4
        %v409 = vor.u32 %v408, %v404
        %v410 = vrot.slane %v409, 4
        %v412 = vshll.u32 %v374, 16
        %v414 = vrot.slane %v412, 5
        %v415 = vsel %vm381, %v410, %v414
        %v416 = vshrl.u32 %v374, 16
        %v418 = vrot.slane %v416, 4
        %v419 = vor.u32 %v418, %v414
        %v420 = vrot.slane %v419, 4
        %v422 = vshll.u32 %v375, 16
        %v424 = vrot.slane %v422, 5
        %v425 = vsel %vm381, %v420, %v424
        %v426 = vshrl.u32 %v375, 16
        %v428 = vrot.slane %v426, 4
        %v429 = vor.u32 %v428, %v424
        %v430 = vrot.slane %v429, 4
        %v432 = vshll.u32 %v376, 16
        %v434 = vrot.slane %v432, 5
        %v435 = vsel %vm381, %v430, %v434
        %v436 = vshrl.u32 %v376, 16
        %v438 = vrot.slane %v436, 4
        %v439 = vor.u32 %v438, %v434
        %v440 = vrot.slane %v439, 4
        %v442 = vshll.u32 %v377, 16
        %v444 = vrot.slane %v442, 5
        %v445 = vsel %vm381, %v440, %v444
        %v446 = vshrl.u32 %v377, 16
        %v448 = vrot.slane %v446, 4
        %v449 = vor.u32 %v448, %v444
        %v450 = vrot.slane %v449, 4
        %v452 = vshll.u32 %v378, 16
        %v454 = vrot.slane %v452, 5
        %v455 = vsel %vm381, %v450, %v454
        %v456 = vshrl.u32 %v378, 16
        %v458 = vrot.slane %v456, 4
        %v459 = vor.u32 %v458, %v454
        %v460 = vrot.slane %v459, 4
        %v461 = vunpack.c.l.b16 %v385
        %v462 = vunpack.c.h.b16 %v385
        %v463 = vunpack.c.l.b16 0
        %v464 = vunpack.c.h.b16 0
        %vm465 = vcmp.ne.s32.totalorder %v461, %v463
        %vm466 = vcmp.ne.s32.totalorder %v462, %v464
        %vm467 = vmpackc.low %vm466, %vm465
        %v468 = vunpack.c.l.b16 %v395
        %v469 = vunpack.c.h.b16 %v395
        %v470 = vunpack.c.l.b16 0
        %v471 = vunpack.c.h.b16 0
        %vm472 = vcmp.ne.s32.totalorder %v468, %v470
        %vm473 = vcmp.ne.s32.totalorder %v469, %v471
        %vm474 = vmpackc.low %vm473, %vm472
        %v475 = vunpack.c.l.b16 %v405
        %v476 = vunpack.c.h.b16 %v405
        %v477 = vunpack.c.l.b16 0
        %v478 = vunpack.c.h.b16 0
        %vm479 = vcmp.ne.s32.totalorder %v475, %v477
        %vm480 = vcmp.ne.s32.totalorder %v476, %v478
        %vm481 = vmpackc.low %vm480, %vm479
        %v482 = vunpack.c.l.b16 %v415
        %v483 = vunpack.c.h.b16 %v415
        %v484 = vunpack.c.l.b16 0
        %v485 = vunpack.c.h.b16 0
        %vm486 = vcmp.ne.s32.totalorder %v482, %v484
        %vm487 = vcmp.ne.s32.totalorder %v483, %v485
        %vm488 = vmpackc.low %vm487, %vm486
        %v489 = vunpack.c.l.b16 %v425
        %v490 = vunpack.c.h.b16 %v425
        %v491 = vunpack.c.l.b16 0
        %v492 = vunpack.c.h.b16 0
        %vm493 = vcmp.ne.s32.totalorder %v489, %v491
        %vm494 = vcmp.ne.s32.totalorder %v490, %v492
        %vm495 = vmpackc.low %vm494, %vm493
        %v496 = vunpack.c.l.b16 %v435
        %v497 = vunpack.c.h.b16 %v435
        %v498 = vunpack.c.l.b16 0
        %v499 = vunpack.c.h.b16 0
        %vm500 = vcmp.ne.s32.totalorder %v496, %v498
        %vm501 = vcmp.ne.s32.totalorder %v497, %v499
        %vm502 = vmpackc.low %vm501, %vm500
        %v503 = vunpack.c.l.b16 %v445
        %v504 = vunpack.c.h.b16 %v445
        %v505 = vunpack.c.l.b16 0
        %v506 = vunpack.c.h.b16 0
        %vm507 = vcmp.ne.s32.totalorder %v503, %v505
        %vm508 = vcmp.ne.s32.totalorder %v504, %v506
        %vm509 = vmpackc.low %vm508, %vm507
        %v510 = vunpack.c.l.b16 %v455
        %v511 = vunpack.c.h.b16 %v455
        %v512 = vunpack.c.l.b16 0
        %v513 = vunpack.c.h.b16 0
        %vm514 = vcmp.ne.s32.totalorder %v510, %v512
        %vm515 = vcmp.ne.s32.totalorder %v511, %v513
        %vm516 = vmpackc.low %vm515, %vm514
        %v517 = vunpack.c.l.b16 %v460
        %v518 = vunpack.c.h.b16 %v460
        %v519 = vunpack.c.l.b16 0
        %v520 = vunpack.c.h.b16 0
        %vm521 = vcmp.ne.s32.totalorder %v517, %v519
        %vm522 = vcmp.ne.s32.totalorder %v518, %v520
        %vm523 = vmpackc.low %vm522, %vm521
        %v524 = vsel %vm467, %v354, 0
        %v525 = vsel %vm474, %v355, 0
        %v526 = vsel %vm481, %v356, 0
        %v527 = vsel %vm488, %v357, 0
        %v528 = vsel %vm495, %v358, 0
        %v529 = vsel %vm502, %v359, 0
        %v530 = vsel %vm509, %v360, 0
        %v531 = vsel %vm516, %v361, 0
        %v532 = vsel %vm523, %v362, 0
        %vm533 = vsmask.f32 256
        %vm534 = vsmask.f32 4368
        %vm535 = vmor %vm533, %vm534
        %v537 = vshrl.u32 %v524, 16
        %v539 = vrot.slane %v537, 7
        %v540 = vrot.slane %v539, 4
        %v542 = vshrl.u32 %v525, 16
        %v544 = vrot.slane %v542, 7
        %v545 = vshll.u32 %v525, 16
        %v547 = vor.u32 %v544, %v545
        %v548 = vsel %vm535, %v540, %v547
        %v549 = vrot.slane %v544, 4
        %v551 = vshrl.u32 %v526, 16
        %v553 = vrot.slane %v551, 7
        %v554 = vshll.u32 %v526, 16
        %v556 = vor.u32 %v553, %v554
        %v557 = vsel %vm535, %v549, %v556
        %v558 = vrot.slane %v553, 4
        %v560 = vshrl.u32 %v527, 16
        %v562 = vrot.slane %v560, 7
        %v563 = vshll.u32 %v527, 16
        %v565 = vor.u32 %v562, %v563
        %v566 = vsel %vm535, %v558, %v565
        %v567 = vrot.slane %v562, 4
        %v569 = vshrl.u32 %v528, 16
        %v571 = vrot.slane %v569, 7
        %v572 = vshll.u32 %v528, 16
        %v574 = vor.u32 %v571, %v572
        %v575 = vsel %vm535, %v567, %v574
        %v576 = vrot.slane %v571, 4
        %v578 = vshrl.u32 %v529, 16
        %v580 = vrot.slane %v578, 7
        %v581 = vshll.u32 %v529, 16
        %v583 = vor.u32 %v580, %v581
        %v584 = vsel %vm535, %v576, %v583
        %v585 = vrot.slane %v580, 4
        %v587 = vshrl.u32 %v530, 16
        %v589 = vrot.slane %v587, 7
        %v590 = vshll.u32 %v530, 16
        %v592 = vor.u32 %v589, %v590
        %v593 = vsel %vm535, %v585, %v592
        %v594 = vrot.slane %v589, 4
        %v596 = vshrl.u32 %v531, 16
        %v598 = vrot.slane %v596, 7
        %v599 = vshll.u32 %v531, 16
        %v601 = vor.u32 %v598, %v599
        %v602 = vsel %vm535, %v594, %v601
        %v603 = vrot.slane %v598, 4
        %v605 = vshrl.u32 %v532, 16
        %v607 = vrot.slane %v605, 7
        %v608 = vshll.u32 %v532, 16
        %v610 = vor.u32 %v607, %v608
        %v611 = vsel %vm535, %v603, %v610
        %620 = vst.msk [vmem:[#allocation3] sm:$0xf] %vm172, %v548
        %621 = vst.msk [vmem:[#allocation3 + $0x8] sm:$0xf] %vm172, %v557
        %622 = vst.msk [vmem:[#allocation3 + $0x10] sm:$0xf] %vm172, %v566
        %623 = vst.msk [vmem:[#allocation3 + $0x18] sm:$0xf] %vm172, %v575
        %624 = vst.msk [vmem:[#allocation3 + $0x20] sm:$0xf] %vm172, %v584
        %625 = vst.msk [vmem:[#allocation3 + $0x28] sm:$0xf] %vm172, %v593
        %626 = vst.msk [vmem:[#allocation3 + $0x30] sm:$0xf] %vm172, %v602
        %627 = vst.msk [vmem:[#allocation3 + $0x38] sm:$0xf] %vm172, %v611
        %v628 = vld [vmem:[#allocation2 + $0x4] sm:$0xf]
        %v629 = vld [vmem:[#allocation2 + $0x8] sm:$0xf]
        %v630 = vld [vmem:[#allocation2 + $0xc] sm:$0xf]
        %v631 = vld [vmem:[#allocation2 + $0x10] sm:$0xf]
        %v632 = vld [vmem:[#allocation2 + $0x14] sm:$0xf]
        %v633 = vld [vmem:[#allocation2 + $0x18] sm:$0xf]
        %v634 = vld [vmem:[#allocation2 + $0x1c] sm:$0xf]
        %v635 = vld [vmem:[#allocation2 + $0x20] sm:$0xf]
        %644 = vrot.lane.b32.xlu0 %v628, 16
        %v645 = vpop.permute.xlu0 %644
        %646 = vrot.lane.b32.xlu0 %v629, 16
        %v647 = vpop.permute.xlu0 %646
        %648 = vrot.lane.b32.xlu0 %v630, 16
        %v649 = vpop.permute.xlu0 %648
        %650 = vrot.lane.b32.xlu0 %v631, 16
        %v651 = vpop.permute.xlu0 %650
        %652 = vrot.lane.b32.xlu0 %v632, 16
        %v653 = vpop.permute.xlu0 %652
        %654 = vrot.lane.b32.xlu0 %v633, 16
        %v655 = vpop.permute.xlu0 %654
        %656 = vrot.lane.b32.xlu0 %v634, 16
        %v657 = vpop.permute.xlu0 %656
        %658 = vrot.lane.b32.xlu0 %v635, 16
        %v659 = vpop.permute.xlu0 %658
        %vm668 = vcmask 257152
        %669 = vst.msk [vmem:[#allocation3] sm:$0xf] %vm668, %v645
        %670 = vst.msk [vmem:[#allocation3 + $0x8] sm:$0xf] %vm668, %v647
        %671 = vst.msk [vmem:[#allocation3 + $0x10] sm:$0xf] %vm668, %v649
        %672 = vst.msk [vmem:[#allocation3 + $0x18] sm:$0xf] %vm668, %v651
        %673 = vst.msk [vmem:[#allocation3 + $0x20] sm:$0xf] %vm668, %v653
        %674 = vst.msk [vmem:[#allocation3 + $0x28] sm:$0xf] %vm668, %v655
        %675 = vst.msk [vmem:[#allocation3 + $0x30] sm:$0xf] %vm668, %v657
        %676 = vst.msk [vmem:[#allocation3 + $0x38] sm:$0xf] %vm668, %v659
        %v677 = vld [vmem:[#allocation2 + $0x4] sm:$0xf]
        %v678 = vld [vmem:[#allocation2 + $0x8] sm:$0xf]
        %v679 = vld [vmem:[#allocation2 + $0xc] sm:$0xf]
        %v680 = vld [vmem:[#allocation2 + $0x10] sm:$0xf]
        %v681 = vld [vmem:[#allocation2 + $0x14] sm:$0xf]
        %v682 = vld [vmem:[#allocation2 + $0x18] sm:$0xf]
        %v683 = vld [vmem:[#allocation2 + $0x1c] sm:$0xf]
        %v684 = vld [vmem:[#allocation2 + $0x20] sm:$0xf]
        %v685 = vld [vmem:[#allocation2 + $0x24] sm:$0x1]
        %vm686 = vmpackc.low %vm346, %vm346
        %vm687 = vmpackc.low %vm347, %vm347
        %vm688 = vmpackc.low %vm348, %vm348
        %vm689 = vmpackc.low %vm349, %vm349
        %vm690 = vmpackc.low %vm350, %vm350
        %vm691 = vmpackc.low %vm351, %vm351
        %vm692 = vmpackc.low %vm352, %vm352
        %vm693 = vmpackc.low %vm353, %vm353
        %v694 = vsel %vm686, 65537, 0
        %v695 = vsel %vm687, 65537, 0
        %v696 = vsel %vm688, 65537, 0
        %v697 = vsel %vm689, 65537, 0
        %v698 = vsel %vm690, 65537, 0
        %v699 = vsel %vm691, 65537, 0
        %v700 = vsel %vm692, 65537, 0
        %v701 = vsel %vm693, 65537, 0
        %v703 = vshrl.u32 %v694, 16
        %v705 = vrot.slane %v703, 7
        %v706 = vshll.u32 %v694, 16
        %v708 = vor.u32 %v705, %v706
        %v709 = vrot.slane %v705, 4
        %v711 = vshrl.u32 %v695, 16
        %v713 = vrot.slane %v711, 7
        %v714 = vshll.u32 %v695, 16
        %v716 = vor.u32 %v713, %v714
        %v717 = vsel %vm535, %v709, %v716
        %v718 = vrot.slane %v713, 4
        %v720 = vshrl.u32 %v696, 16
        %v722 = vrot.slane %v720, 7
        %v723 = vshll.u32 %v696, 16
        %v725 = vor.u32 %v722, %v723
        %v726 = vsel %vm535, %v718, %v725
        %v727 = vrot.slane %v722, 4
        %v729 = vshrl.u32 %v697, 16
        %v731 = vrot.slane %v729, 7
        %v732 = vshll.u32 %v697, 16
        %v734 = vor.u32 %v731, %v732
        %v735 = vsel %vm535, %v727, %v734
        %v736 = vrot.slane %v731, 4
        %v738 = vshrl.u32 %v698, 16
        %v740 = vrot.slane %v738, 7
        %v741 = vshll.u32 %v698, 16
        %v743 = vor.u32 %v740, %v741
        %v744 = vsel %vm535, %v736, %v743
        %v745 = vrot.slane %v740, 4
        %v747 = vshrl.u32 %v699, 16
        %v749 = vrot.slane %v747, 7
        %v750 = vshll.u32 %v699, 16
        %v752 = vor.u32 %v749, %v750
        %v753 = vsel %vm535, %v745, %v752
        %v754 = vrot.slane %v749, 4
        %v756 = vshrl.u32 %v700, 16
        %v758 = vrot.slane %v756, 7
        %v759 = vshll.u32 %v700, 16
        %v761 = vor.u32 %v758, %v759
        %v762 = vsel %vm535, %v754, %v761
        %v763 = vrot.slane %v758, 4
        %v765 = vshrl.u32 %v701, 16
        %v767 = vrot.slane %v765, 7
        %v768 = vshll.u32 %v701, 16
        %v770 = vor.u32 %v767, %v768
        %v771 = vsel %vm535, %v763, %v770
        %v772 = vrot.slane %v767, 4
        %v773 = vunpack.c.l.b16 %v708
        %v774 = vunpack.c.h.b16 %v708
        %v775 = vunpack.c.l.b16 0
        %v776 = vunpack.c.h.b16 0
        %vm777 = vcmp.ne.s32.totalorder %v773, %v775
        %vm778 = vcmp.ne.s32.totalorder %v774, %v776
        %vm779 = vmpackc.low %vm778, %vm777
        %v780 = vunpack.c.l.b16 %v717
        %v781 = vunpack.c.h.b16 %v717
        %v782 = vunpack.c.l.b16 0
        %v783 = vunpack.c.h.b16 0
        %vm784 = vcmp.ne.s32.totalorder %v780, %v782
        %vm785 = vcmp.ne.s32.totalorder %v781, %v783
        %vm786 = vmpackc.low %vm785, %vm784
        %v787 = vunpack.c.l.b16 %v726
        %v788 = vunpack.c.h.b16 %v726
        %v789 = vunpack.c.l.b16 0
        %v790 = vunpack.c.h.b16 0
        %vm791 = vcmp.ne.s32.totalorder %v787, %v789
        %vm792 = vcmp.ne.s32.totalorder %v788, %v790
        %vm793 = vmpackc.low %vm792, %vm791
        %v794 = vunpack.c.l.b16 %v735
        %v795 = vunpack.c.h.b16 %v735
        %v796 = vunpack.c.l.b16 0
        %v797 = vunpack.c.h.b16 0
        %vm798 = vcmp.ne.s32.totalorder %v794, %v796
        %vm799 = vcmp.ne.s32.totalorder %v795, %v797
        %vm800 = vmpackc.low %vm799, %vm798
        %v801 = vunpack.c.l.b16 %v744
        %v802 = vunpack.c.h.b16 %v744
        %v803 = vunpack.c.l.b16 0
        %v804 = vunpack.c.h.b16 0
        %vm805 = vcmp.ne.s32.totalorder %v801, %v803
        %vm806 = vcmp.ne.s32.totalorder %v802, %v804
        %vm807 = vmpackc.low %vm806, %vm805
        %v808 = vunpack.c.l.b16 %v753
        %v809 = vunpack.c.h.b16 %v753
        %v810 = vunpack.c.l.b16 0
        %v811 = vunpack.c.h.b16 0
        %vm812 = vcmp.ne.s32.totalorder %v808, %v810
        %vm813 = vcmp.ne.s32.totalorder %v809, %v811
        %vm814 = vmpackc.low %vm813, %vm812
        %v815 = vunpack.c.l.b16 %v762
        %v816 = vunpack.c.h.b16 %v762
        %v817 = vunpack.c.l.b16 0
        %v818 = vunpack.c.h.b16 0
        %vm819 = vcmp.ne.s32.totalorder %v815, %v817
        %vm820 = vcmp.ne.s32.totalorder %v816, %v818
        %vm821 = vmpackc.low %vm820, %vm819
        %v822 = vunpack.c.l.b16 %v771
        %v823 = vunpack.c.h.b16 %v771
        %v824 = vunpack.c.l.b16 0
        %v825 = vunpack.c.h.b16 0
        %vm826 = vcmp.ne.s32.totalorder %v822, %v824
        %vm827 = vcmp.ne.s32.totalorder %v823, %v825
        %vm828 = vmpackc.low %vm827, %vm826
        %v829 = vunpack.c.l.b16 %v772
        %v830 = vunpack.c.h.b16 %v772
        %v831 = vunpack.c.l.b16 0
        %v832 = vunpack.c.h.b16 0
        %vm833 = vcmp.ne.s32.totalorder %v829, %v831
        %vm834 = vcmp.ne.s32.totalorder %v830, %v832
        %vm835 = vmpackc.low %vm834, %vm833
        %v836 = vsel %vm779, %v677, 0
        %v837 = vsel %vm786, %v678, 0
        %v838 = vsel %vm793, %v679, 0
        %v839 = vsel %vm800, %v680, 0
        %v840 = vsel %vm807, %v681, 0
        %v841 = vsel %vm814, %v682, 0
        %v842 = vsel %vm821, %v683, 0
        %v843 = vsel %vm828, %v684, 0
        %v844 = vsel %vm835, %v685, 0
        %v846 = vshrl.u32 %v836, 16
        %v848 = vrot.slane %v846, 4
        %v849 = vshll.u32 %v836, 16
        %v851 = vrot.slane %v849, 5
        %v852 = vor.u32 %v848, %v851
        %v853 = vrot.slane %v852, 4
        %v855 = vshll.u32 %v837, 16
        %v857 = vrot.slane %v855, 5
        %v858 = vsel %vm381, %v853, %v857
        %v859 = vshrl.u32 %v837, 16
        %v861 = vrot.slane %v859, 4
        %v862 = vor.u32 %v861, %v857
        %v863 = vrot.slane %v862, 4
        %v865 = vshll.u32 %v838, 16
        %v867 = vrot.slane %v865, 5
        %v868 = vsel %vm381, %v863, %v867
        %v869 = vshrl.u32 %v838, 16
        %v871 = vrot.slane %v869, 4
        %v872 = vor.u32 %v871, %v867
        %v873 = vrot.slane %v872, 4
        %v875 = vshll.u32 %v839, 16
        %v877 = vrot.slane %v875, 5
        %v878 = vsel %vm381, %v873, %v877
        %v879 = vshrl.u32 %v839, 16
        %v881 = vrot.slane %v879, 4
        %v882 = vor.u32 %v881, %v877
        %v883 = vrot.slane %v882, 4
        %v885 = vshll.u32 %v840, 16
        %v887 = vrot.slane %v885, 5
        %v888 = vsel %vm381, %v883, %v887
        %v889 = vshrl.u32 %v840, 16
        %v891 = vrot.slane %v889, 4
        %v892 = vor.u32 %v891, %v887
        %v893 = vrot.slane %v892, 4
        %v895 = vshll.u32 %v841, 16
        %v897 = vrot.slane %v895, 5
        %v898 = vsel %vm381, %v893, %v897
        %v899 = vshrl.u32 %v841, 16
        %v901 = vrot.slane %v899, 4
        %v902 = vor.u32 %v901, %v897
        %v903 = vrot.slane %v902, 4
        %v905 = vshll.u32 %v842, 16
        %v907 = vrot.slane %v905, 5
        %v908 = vsel %vm381, %v903, %v907
        %v909 = vshrl.u32 %v842, 16
        %v911 = vrot.slane %v909, 4
        %v912 = vor.u32 %v911, %v907
        %v913 = vrot.slane %v912, 4
        %v915 = vshll.u32 %v843, 16
        %v917 = vrot.slane %v915, 5
        %v918 = vsel %vm381, %v913, %v917
        %v919 = vshrl.u32 %v843, 16
        %v921 = vrot.slane %v919, 4
        %v922 = vor.u32 %v921, %v917
        %v923 = vrot.slane %v922, 4
        %v925 = vshll.u32 %v844, 16
        %v927 = vrot.slane %v925, 5
        %v928 = vsel %vm381, %v923, %v927
        %929 = vrot.lane.b32.xlu0 %v858, 32
        %v930 = vpop.permute.xlu0 %929
        %931 = vrot.lane.b32.xlu0 %v868, 32
        %v932 = vpop.permute.xlu0 %931
        %933 = vrot.lane.b32.xlu0 %v878, 32
        %v934 = vpop.permute.xlu0 %933
        %935 = vrot.lane.b32.xlu0 %v888, 32
        %v936 = vpop.permute.xlu0 %935
        %937 = vrot.lane.b32.xlu0 %v898, 32
        %v938 = vpop.permute.xlu0 %937
        %939 = vrot.lane.b32.xlu0 %v908, 32
        %v940 = vpop.permute.xlu0 %939
        %941 = vrot.lane.b32.xlu0 %v918, 32
        %v942 = vpop.permute.xlu0 %941
        %943 = vrot.lane.b32.xlu0 %v928, 32
        %v944 = vpop.permute.xlu0 %943
        %vm953 = vcmask 388352
        %954 = vst.msk [vmem:[#allocation3] sm:$0xf] %vm953, %v930
        %955 = vst.msk [vmem:[#allocation3 + $0x8] sm:$0xf] %vm953, %v932
        %956 = vst.msk [vmem:[#allocation3 + $0x10] sm:$0xf] %vm953, %v934
        %957 = vst.msk [vmem:[#allocation3 + $0x18] sm:$0xf] %vm953, %v936
        %958 = vst.msk [vmem:[#allocation3 + $0x20] sm:$0xf] %vm953, %v938
        %959 = vst.msk [vmem:[#allocation3 + $0x28] sm:$0xf] %vm953, %v940
        %960 = vst.msk [vmem:[#allocation3 + $0x30] sm:$0xf] %vm953, %v942
        %961 = vst.msk [vmem:[#allocation3 + $0x38] sm:$0xf] %vm953, %v944
        %v962 = vld [vmem:[#allocation2 + $0x4] sm:$0x8]
        %v963 = vld [vmem:[#allocation2 + $0x8] sm:$0xf]
        %v964 = vld [vmem:[#allocation2 + $0xc] sm:$0xf]
        %v965 = vld [vmem:[#allocation2 + $0x10] sm:$0xf]
        %v966 = vld [vmem:[#allocation2 + $0x14] sm:$0xf]
        %v967 = vld [vmem:[#allocation2 + $0x18] sm:$0xf]
        %v968 = vld [vmem:[#allocation2 + $0x1c] sm:$0xf]
        %v969 = vld [vmem:[#allocation2 + $0x20] sm:$0xf]
        %v970 = vld [vmem:[#allocation2 + $0x24] sm:$0xf]
        %v971 = vsel %vm467, %v962, 0
        %v972 = vsel %vm474, %v963, 0
        %v973 = vsel %vm481, %v964, 0
        %v974 = vsel %vm488, %v965, 0
        %v975 = vsel %vm495, %v966, 0
        %v976 = vsel %vm502, %v967, 0
        %v977 = vsel %vm509, %v968, 0
        %v978 = vsel %vm516, %v969, 0
        %v979 = vsel %vm523, %v970, 0
        %v981 = vshrl.u32 %v971, 16
        %v983 = vrot.slane %v981, 7
        %v984 = vrot.slane %v983, 4
        %v986 = vshrl.u32 %v972, 16
        %v988 = vrot.slane %v986, 7
        %v989 = vshll.u32 %v972, 16
        %v991 = vor.u32 %v988, %v989
        %v992 = vsel %vm535, %v984, %v991
        %v993 = vrot.slane %v988, 4
        %v995 = vshrl.u32 %v973, 16
        %v997 = vrot.slane %v995, 7
        %v998 = vshll.u32 %v973, 16
        %v1000 = vor.u32 %v997, %v998
        %v1001 = vsel %vm535, %v993, %v1000
        %v1002 = vrot.slane %v997, 4
        %v1004 = vshrl.u32 %v974, 16
        %v1006 = vrot.slane %v1004, 7
        %v1007 = vshll.u32 %v974, 16
        %v1009 = vor.u32 %v1006, %v1007
        %v1010 = vsel %vm535, %v1002, %v1009
        %v1011 = vrot.slane %v1006, 4
        %v1013 = vshrl.u32 %v975, 16
        %v1015 = vrot.slane %v1013, 7
        %v1016 = vshll.u32 %v975, 16
        %v1018 = vor.u32 %v1015, %v1016
        %v1019 = vsel %vm535, %v1011, %v1018
        %v1020 = vrot.slane %v1015, 4
        %v1022 = vshrl.u32 %v976, 16
        %v1024 = vrot.slane %v1022, 7
        %v1025 = vshll.u32 %v976, 16
        %v1027 = vor.u32 %v1024, %v1025
        %v1028 = vsel %vm535, %v1020, %v1027
        %v1029 = vrot.slane %v1024, 4
        %v1031 = vshrl.u32 %v977, 16
        %v1033 = vrot.slane %v1031, 7
        %v1034 = vshll.u32 %v977, 16
        %v1036 = vor.u32 %v1033, %v1034
        %v1037 = vsel %vm535, %v1029, %v1036
        %v1038 = vrot.slane %v1033, 4
        %v1040 = vshrl.u32 %v978, 16
        %v1042 = vrot.slane %v1040, 7
        %v1043 = vshll.u32 %v978, 16
        %v1045 = vor.u32 %v1042, %v1043
        %v1046 = vsel %vm535, %v1038, %v1045
        %v1047 = vrot.slane %v1042, 4
        %v1049 = vshrl.u32 %v979, 16
        %v1051 = vrot.slane %v1049, 7
        %v1052 = vshll.u32 %v979, 16
        %v1054 = vor.u32 %v1051, %v1052
        %v1055 = vsel %vm535, %v1047, %v1054
        %1056 = vrot.lane.b32.xlu0 %v992, 48
        %v1057 = vpop.permute.xlu0 %1056
        %1058 = vrot.lane.b32.xlu0 %v1001, 48
        %v1059 = vpop.permute.xlu0 %1058
        %1060 = vrot.lane.b32.xlu0 %v1010, 48
        %v1061 = vpop.permute.xlu0 %1060
        %1062 = vrot.lane.b32.xlu0 %v1019, 48
        %v1063 = vpop.permute.xlu0 %1062
        %1064 = vrot.lane.b32.xlu0 %v1028, 48
        %v1065 = vpop.permute.xlu0 %1064
        %1066 = vrot.lane.b32.xlu0 %v1037, 48
        %v1067 = vpop.permute.xlu0 %1066
        %1068 = vrot.lane.b32.xlu0 %v1046, 48
        %v1069 = vpop.permute.xlu0 %1068
        %1070 = vrot.lane.b32.xlu0 %v1055, 48
        %v1071 = vpop.permute.xlu0 %1070
        %vm1080 = vcmask 519552
        %1081 = vst.msk [vmem:[#allocation3] sm:$0xf] %vm1080, %v1057
        %1082 = vst.msk [vmem:[#allocation3 + $0x8] sm:$0xf] %vm1080, %v1059
        %1083 = vst.msk [vmem:[#allocation3 + $0x10] sm:$0xf] %vm1080, %v1061
        %1084 = vst.msk [vmem:[#allocation3 + $0x18] sm:$0xf] %vm1080, %v1063
        %1085 = vst.msk [vmem:[#allocation3 + $0x20] sm:$0xf] %vm1080, %v1065
        %1086 = vst.msk [vmem:[#allocation3 + $0x28] sm:$0xf] %vm1080, %v1067
        %1087 = vst.msk [vmem:[#allocation3 + $0x30] sm:$0xf] %vm1080, %v1069
        %1088 = vst.msk [vmem:[#allocation3 + $0x38] sm:$0xf] %vm1080, %v1071
        %v1089 = vld [vmem:[#allocation2 + $0x8] sm:$0xf]
        %v1090 = vld [vmem:[#allocation2 + $0xc] sm:$0xf]
        %v1091 = vld [vmem:[#allocation2 + $0x10] sm:$0xf]
        %v1092 = vld [vmem:[#allocation2 + $0x14] sm:$0xf]
        %v1093 = vld [vmem:[#allocation2 + $0x18] sm:$0xf]
        %v1094 = vld [vmem:[#allocation2 + $0x1c] sm:$0xf]
        %v1095 = vld [vmem:[#allocation2 + $0x20] sm:$0xf]
        %v1096 = vld [vmem:[#allocation2 + $0x24] sm:$0xf]
        %1105 = vrot.lane.b32.xlu0 %v1089, 64
        %v1106 = vpop.permute.xlu0 %1105
        %1107 = vrot.lane.b32.xlu0 %v1090, 64
        %v1108 = vpop.permute.xlu0 %1107
        %1109 = vrot.lane.b32.xlu0 %v1091, 64
        %v1110 = vpop.permute.xlu0 %1109
        %1111 = vrot.lane.b32.xlu0 %v1092, 64
        %v1112 = vpop.permute.xlu0 %1111
        %1113 = vrot.lane.b32.xlu0 %v1093, 64
        %v1114 = vpop.permute.xlu0 %1113
        %1115 = vrot.lane.b32.xlu0 %v1094, 64
        %v1116 = vpop.permute.xlu0 %1115
        %1117 = vrot.lane.b32.xlu0 %v1095, 64
        %v1118 = vpop.permute.xlu0 %1117
        %1119 = vrot.lane.b32.xlu0 %v1096, 64
        %v1120 = vpop.permute.xlu0 %1119
        %vm1129 = vcmask 650752
        %1130 = vst.msk [vmem:[#allocation3] sm:$0xf] %vm1129, %v1106
        %1131 = vst.msk [vmem:[#allocation3 + $0x8] sm:$0xf] %vm1129, %v1108
        %1132 = vst.msk [vmem:[#allocation3 + $0x10] sm:$0xf] %vm1129, %v1110
        %1133 = vst.msk [vmem:[#allocation3 + $0x18] sm:$0xf] %vm1129, %v1112
        %1134 = vst.msk [vmem:[#allocation3 + $0x20] sm:$0xf] %vm1129, %v1114
        %1135 = vst.msk [vmem:[#allocation3 + $0x28] sm:$0xf] %vm1129, %v1116
        %1136 = vst.msk [vmem:[#allocation3 + $0x30] sm:$0xf] %vm1129, %v1118
        %1137 = vst.msk [vmem:[#allocation3 + $0x38] sm:$0xf] %vm1129, %v1120
        %v1138 = vld [vmem:[#allocation2 + $0x8] sm:$0xf]
        %v1139 = vld [vmem:[#allocation2 + $0xc] sm:$0xf]
        %v1140 = vld [vmem:[#allocation2 + $0x10] sm:$0xf]
        %v1141 = vld [vmem:[#allocation2 + $0x14] sm:$0xf]
        %v1142 = vld [vmem:[#allocation2 + $0x18] sm:$0xf]
        %v1143 = vld [vmem:[#allocation2 + $0x1c] sm:$0xf]
        %v1144 = vld [vmem:[#allocation2 + $0x20] sm:$0xf]
        %v1145 = vld [vmem:[#allocation2 + $0x24] sm:$0xf]
        %v1146 = vld [vmem:[#allocation2 + $0x28] sm:$0x1]
        %v1147 = vsel %vm779, %v1138, 0
        %v1148 = vsel %vm786, %v1139, 0
        %v1149 = vsel %vm793, %v1140, 0
        %v1150 = vsel %vm800, %v1141, 0
        %v1151 = vsel %vm807, %v1142, 0
        %v1152 = vsel %vm814, %v1143, 0
        %v1153 = vsel %vm821, %v1144, 0
        %v1154 = vsel %vm828, %v1145, 0
        %v1155 = vsel %vm835, %v1146, 0
        %v1157 = vshrl.u32 %v1147, 16
        %v1159 = vrot.slane %v1157, 4
        %v1160 = vshll.u32 %v1147, 16
        %v1162 = vrot.slane %v1160, 5
        %v1163 = vor.u32 %v1159, %v1162
        %v1164 = vrot.slane %v1163, 4
        %v1166 = vshll.u32 %v1148, 16
        %v1168 = vrot.slane %v1166, 5
        %v1169 = vsel %vm381, %v1164, %v1168
        %v1170 = vshrl.u32 %v1148, 16
        %v1172 = vrot.slane %v1170, 4
        %v1173 = vor.u32 %v1172, %v1168
        %v1174 = vrot.slane %v1173, 4
        %v1176 = vshll.u32 %v1149, 16
        %v1178 = vrot.slane %v1176, 5
        %v1179 = vsel %vm381, %v1174, %v1178
        %v1180 = vshrl.u32 %v1149, 16
        %v1182 = vrot.slane %v1180, 4
        %v1183 = vor.u32 %v1182, %v1178
        %v1184 = vrot.slane %v1183, 4
        %v1186 = vshll.u32 %v1150, 16
        %v1188 = vrot.slane %v1186, 5
        %v1189 = vsel %vm381, %v1184, %v1188
        %v1190 = vshrl.u32 %v1150, 16
        %v1192 = vrot.slane %v1190, 4
        %v1193 = vor.u32 %v1192, %v1188
        %v1194 = vrot.slane %v1193, 4
        %v1196 = vshll.u32 %v1151, 16
        %v1198 = vrot.slane %v1196, 5
        %v1199 = vsel %vm381, %v1194, %v1198
        %v1200 = vshrl.u32 %v1151, 16
        %v1202 = vrot.slane %v1200, 4
        %v1203 = vor.u32 %v1202, %v1198
        %v1204 = vrot.slane %v1203, 4
        %v1206 = vshll.u32 %v1152, 16
        %v1208 = vrot.slane %v1206, 5
        %v1209 = vsel %vm381, %v1204, %v1208
        %v1210 = vshrl.u32 %v1152, 16
        %v1212 = vrot.slane %v1210, 4
        %v1213 = vor.u32 %v1212, %v1208
        %v1214 = vrot.slane %v1213, 4
        %v1216 = vshll.u32 %v1153, 16
        %v1218 = vrot.slane %v1216, 5
        %v1219 = vsel %vm381, %v1214, %v1218
        %v1220 = vshrl.u32 %v1153, 16
        %v1222 = vrot.slane %v1220, 4
        %v1223 = vor.u32 %v1222, %v1218
        %v1224 = vrot.slane %v1223, 4
        %v1226 = vshll.u32 %v1154, 16
        %v1228 = vrot.slane %v1226, 5
        %v1229 = vsel %vm381, %v1224, %v1228
        %v1230 = vshrl.u32 %v1154, 16
        %v1232 = vrot.slane %v1230, 4
        %v1233 = vor.u32 %v1232, %v1228
        %v1234 = vrot.slane %v1233, 4
        %v1236 = vshll.u32 %v1155, 16
        %v1238 = vrot.slane %v1236, 5
        %v1239 = vsel %vm381, %v1234, %v1238
        %1240 = vrot.lane.b32.xlu0 %v1169, 80
        %v1241 = vpop.permute.xlu0 %1240
        %1242 = vrot.lane.b32.xlu0 %v1179, 80
        %v1243 = vpop.permute.xlu0 %1242
        %1244 = vrot.lane.b32.xlu0 %v1189, 80
        %v1245 = vpop.permute.xlu0 %1244
        %1246 = vrot.lane.b32.xlu0 %v1199, 80
        %v1247 = vpop.permute.xlu0 %1246
        %1248 = vrot.lane.b32.xlu0 %v1209, 80
        %v1249 = vpop.permute.xlu0 %1248
        %1250 = vrot.lane.b32.xlu0 %v1219, 80
        %v1251 = vpop.permute.xlu0 %1250
        %1252 = vrot.lane.b32.xlu0 %v1229, 80
        %v1253 = vpop.permute.xlu0 %1252
        %1254 = vrot.lane.b32.xlu0 %v1239, 80
        %v1255 = vpop.permute.xlu0 %1254
        %vm1264 = vcmask 781952
        %1265 = vst.msk [vmem:[#allocation3] sm:$0xf] %vm1264, %v1241
        %1266 = vst.msk [vmem:[#allocation3 + $0x8] sm:$0xf] %vm1264, %v1243
        %1267 = vst.msk [vmem:[#allocation3 + $0x10] sm:$0xf] %vm1264, %v1245
        %1268 = vst.msk [vmem:[#allocation3 + $0x18] sm:$0xf] %vm1264, %v1247
        %1269 = vst.msk [vmem:[#allocation3 + $0x20] sm:$0xf] %vm1264, %v1249
        %1270 = vst.msk [vmem:[#allocation3 + $0x28] sm:$0xf] %vm1264, %v1251
        %1271 = vst.msk [vmem:[#allocation3 + $0x30] sm:$0xf] %vm1264, %v1253
        %1272 = vst.msk [vmem:[#allocation3 + $0x38] sm:$0xf] %vm1264, %v1255
        %v1273 = vld [vmem:[#allocation2 + $0x8] sm:$0x8]
        %v1274 = vld [vmem:[#allocation2 + $0xc] sm:$0xf]
        %v1275 = vld [vmem:[#allocation2 + $0x10] sm:$0xf]
        %v1276 = vld [vmem:[#allocation2 + $0x14] sm:$0xf]
        %v1277 = vld [vmem:[#allocation2 + $0x18] sm:$0xf]
        %v1278 = vld [vmem:[#allocation2 + $0x1c] sm:$0xf]
        %v1279 = vld [vmem:[#allocation2 + $0x20] sm:$0xf]
        %v1280 = vld [vmem:[#allocation2 + $0x24] sm:$0xf]
        %v1281 = vld [vmem:[#allocation2 + $0x28] sm:$0xf]
        %v1282 = vsel %vm467, %v1273, 0
        %v1283 = vsel %vm474, %v1274, 0
        %v1284 = vsel %vm481, %v1275, 0
        %v1285 = vsel %vm488, %v1276, 0
        %v1286 = vsel %vm495, %v1277, 0
        %v1287 = vsel %vm502, %v1278, 0
        %v1288 = vsel %vm509, %v1279, 0
        %v1289 = vsel %vm516, %v1280, 0
        %v1290 = vsel %vm523, %v1281, 0
        %v1292 = vshrl.u32 %v1282, 16
        %v1294 = vrot.slane %v1292, 7
        %v1295 = vrot.slane %v1294, 4
        %v1297 = vshrl.u32 %v1283, 16
        %v1299 = vrot.slane %v1297, 7
        %v1300 = vshll.u32 %v1283, 16
        %v1302 = vor.u32 %v1299, %v1300
        %v1303 = vsel %vm535, %v1295, %v1302
        %v1304 = vrot.slane %v1299, 4
        %v1306 = vshrl.u32 %v1284, 16
        %v1308 = vrot.slane %v1306, 7
        %v1309 = vshll.u32 %v1284, 16
        %v1311 = vor.u32 %v1308, %v1309
        %v1312 = vsel %vm535, %v1304, %v1311
        %v1313 = vrot.slane %v1308, 4
        %v1315 = vshrl.u32 %v1285, 16
        %v1317 = vrot.slane %v1315, 7
        %v1318 = vshll.u32 %v1285, 16
        %v1320 = vor.u32 %v1317, %v1318
        %v1321 = vsel %vm535, %v1313, %v1320
        %v1322 = vrot.slane %v1317, 4
        %v1324 = vshrl.u32 %v1286, 16
        %v1326 = vrot.slane %v1324, 7
        %v1327 = vshll.u32 %v1286, 16
        %v1329 = vor.u32 %v1326, %v1327
        %v1330 = vsel %vm535, %v1322, %v1329
        %v1331 = vrot.slane %v1326, 4
        %v1333 = vshrl.u32 %v1287, 16
        %v1335 = vrot.slane %v1333, 7
        %v1336 = vshll.u32 %v1287, 16
        %v1338 = vor.u32 %v1335, %v1336
        %v1339 = vsel %vm535, %v1331, %v1338
        %v1340 = vrot.slane %v1335, 4
        %v1342 = vshrl.u32 %v1288, 16
        %v1344 = vrot.slane %v1342, 7
        %v1345 = vshll.u32 %v1288, 16
        %v1347 = vor.u32 %v1344, %v1345
        %v1348 = vsel %vm535, %v1340, %v1347
        %v1349 = vrot.slane %v1344, 4
        %v1351 = vshrl.u32 %v1289, 16
        %v1353 = vrot.slane %v1351, 7
        %v1354 = vshll.u32 %v1289, 16
        %v1356 = vor.u32 %v1353, %v1354
        %v1357 = vsel %vm535, %v1349, %v1356
        %v1358 = vrot.slane %v1353, 4
        %v1360 = vshrl.u32 %v1290, 16
        %v1362 = vrot.slane %v1360, 7
        %v1363 = vshll.u32 %v1290, 16
        %v1365 = vor.u32 %v1362, %v1363
        %v1366 = vsel %vm535, %v1358, %v1365
        %1367 = vrot.lane.b32.xlu0 %v1303, 96
        %v1368 = vpop.permute.xlu0 %1367
        %1369 = vrot.lane.b32.xlu0 %v1312, 96
        %v1370 = vpop.permute.xlu0 %1369
        %1371 = vrot.lane.b32.xlu0 %v1321, 96
        %v1372 = vpop.permute.xlu0 %1371
        %1373 = vrot.lane.b32.xlu0 %v1330, 96
        %v1374 = vpop.permute.xlu0 %1373
        %1375 = vrot.lane.b32.xlu0 %v1339, 96
        %v1376 = vpop.permute.xlu0 %1375
        %1377 = vrot.lane.b32.xlu0 %v1348, 96
        %v1378 = vpop.permute.xlu0 %1377
        %1379 = vrot.lane.b32.xlu0 %v1357, 96
        %v1380 = vpop.permute.xlu0 %1379
        %1381 = vrot.lane.b32.xlu0 %v1366, 96
        %v1382 = vpop.permute.xlu0 %1381
        %vm1391 = vcmask 913152
        %1392 = vst.msk [vmem:[#allocation3] sm:$0xf] %vm1391, %v1368
        %1393 = vst.msk [vmem:[#allocation3 + $0x8] sm:$0xf] %vm1391, %v1370
        %1394 = vst.msk [vmem:[#allocation3 + $0x10] sm:$0xf] %vm1391, %v1372
        %1395 = vst.msk [vmem:[#allocation3 + $0x18] sm:$0xf] %vm1391, %v1374
        %1396 = vst.msk [vmem:[#allocation3 + $0x20] sm:$0xf] %vm1391, %v1376
        %1397 = vst.msk [vmem:[#allocation3 + $0x28] sm:$0xf] %vm1391, %v1378
        %1398 = vst.msk [vmem:[#allocation3 + $0x30] sm:$0xf] %vm1391, %v1380
        %1399 = vst.msk [vmem:[#allocation3 + $0x38] sm:$0xf] %vm1391, %v1382
        %v1400 = vld [vmem:[#allocation2 + $0xc] sm:$0xf]
        %v1401 = vld [vmem:[#allocation2 + $0x10] sm:$0xf]
        %v1402 = vld [vmem:[#allocation2 + $0x14] sm:$0xf]
        %v1403 = vld [vmem:[#allocation2 + $0x18] sm:$0xf]
        %v1404 = vld [vmem:[#allocation2 + $0x1c] sm:$0xf]
        %v1405 = vld [vmem:[#allocation2 + $0x20] sm:$0xf]
        %v1406 = vld [vmem:[#allocation2 + $0x24] sm:$0xf]
        %v1407 = vld [vmem:[#allocation2 + $0x28] sm:$0xf]
        %1416 = vrot.lane.b32.xlu0 %v1400, 112
        %v1417 = vpop.permute.xlu0 %1416
        %1418 = vrot.lane.b32.xlu0 %v1401, 112
        %v1419 = vpop.permute.xlu0 %1418
        %1420 = vrot.lane.b32.xlu0 %v1402, 112
        %v1421 = vpop.permute.xlu0 %1420
        %1422 = vrot.lane.b32.xlu0 %v1403, 112
        %v1423 = vpop.permute.xlu0 %1422
        %1424 = vrot.lane.b32.xlu0 %v1404, 112
        %v1425 = vpop.permute.xlu0 %1424
        %1426 = vrot.lane.b32.xlu0 %v1405, 112
        %v1427 = vpop.permute.xlu0 %1426
        %1428 = vrot.lane.b32.xlu0 %v1406, 112
        %v1429 = vpop.permute.xlu0 %1428
        %1430 = vrot.lane.b32.xlu0 %v1407, 112
        %v1431 = vpop.permute.xlu0 %1430
        %vm1440 = vcmask 1044352
        %1441 = vst.msk [vmem:[#allocation3] sm:$0xf] %vm1440, %v1417
        %1442 = vst.msk [vmem:[#allocation3 + $0x8] sm:$0xf] %vm1440, %v1419
        %1443 = vst.msk [vmem:[#allocation3 + $0x10] sm:$0xf] %vm1440, %v1421
        %1444 = vst.msk [vmem:[#allocation3 + $0x18] sm:$0xf] %vm1440, %v1423
        %1445 = vst.msk [vmem:[#allocation3 + $0x20] sm:$0xf] %vm1440, %v1425
        %1446 = vst.msk [vmem:[#allocation3 + $0x28] sm:$0xf] %vm1440, %v1427
        %1447 = vst.msk [vmem:[#allocation3 + $0x30] sm:$0xf] %vm1440, %v1429
        %1448 = vst.msk [vmem:[#allocation3 + $0x38] sm:$0xf] %vm1440, %v1431
        %v1449 = vld [vmem:[#allocation2 + $0xc] sm:$0xf]
        %v1450 = vld [vmem:[#allocation2 + $0x10] sm:$0xf]
        %v1451 = vld [vmem:[#allocation2 + $0x14] sm:$0xf]
        %v1452 = vld [vmem:[#allocation2 + $0x18] sm:$0xf]
        %v1453 = vld [vmem:[#allocation2 + $0x1c] sm:$0xf]
        %v1454 = vld [vmem:[#allocation2 + $0x20] sm:$0xf]
        %v1455 = vld [vmem:[#allocation2 + $0x24] sm:$0xf]
        %v1456 = vld [vmem:[#allocation2 + $0x28] sm:$0xf]
        %v1457 = vld [vmem:[#allocation2 + $0x2c] sm:$0x1]
        %v1458 = vsel %vm779, %v1449, 0
        %v1459 = vsel %vm786, %v1450, 0
        %v1460 = vsel %vm793, %v1451, 0
        %v1461 = vsel %vm800, %v1452, 0
        %v1462 = vsel %vm807, %v1453, 0
        %v1463 = vsel %vm814, %v1454, 0
        %v1464 = vsel %vm821, %v1455, 0
        %v1465 = vsel %vm828, %v1456, 0
        %v1466 = vsel %vm835, %v1457, 0
        %v1468 = vshrl.u32 %v1458, 16
        %v1470 = vrot.slane %v1468, 4
        %v1471 = vshll.u32 %v1458, 16
        %v1473 = vrot.slane %v1471, 5
        %v1474 = vor.u32 %v1470, %v1473
        %v1475 = vrot.slane %v1474, 4
        %v1477 = vshll.u32 %v1459, 16
        %v1479 = vrot.slane %v1477, 5
        %v1480 = vsel %vm381, %v1475, %v1479
        %v1481 = vshrl.u32 %v1459, 16
        %v1483 = vrot.slane %v1481, 4
        %v1484 = vor.u32 %v1483, %v1479
        %v1485 = vrot.slane %v1484, 4
        %v1487 = vshll.u32 %v1460, 16
        %v1489 = vrot.slane %v1487, 5
        %v1490 = vsel %vm381, %v1485, %v1489
        %v1491 = vshrl.u32 %v1460, 16
        %v1493 = vrot.slane %v1491, 4
        %v1494 = vor.u32 %v1493, %v1489
        %v1495 = vrot.slane %v1494, 4
        %v1497 = vshll.u32 %v1461, 16
        %v1499 = vrot.slane %v1497, 5
        %v1500 = vsel %vm381, %v1495, %v1499
        %v1501 = vshrl.u32 %v1461, 16
        %v1503 = vrot.slane %v1501, 4
        %v1504 = vor.u32 %v1503, %v1499
        %v1505 = vrot.slane %v1504, 4
        %v1507 = vshll.u32 %v1462, 16
        %v1509 = vrot.slane %v1507, 5
        %v1510 = vsel %vm381, %v1505, %v1509
        %v1511 = vshrl.u32 %v1462, 16
        %v1513 = vrot.slane %v1511, 4
        %v1514 = vor.u32 %v1513, %v1509
        %v1515 = vrot.slane %v1514, 4
        %v1517 = vshll.u32 %v1463, 16
        %v1519 = vrot.slane %v1517, 5
        %v1520 = vsel %vm381, %v1515, %v1519
        %v1521 = vshrl.u32 %v1463, 16
        %v1523 = vrot.slane %v1521, 4
        %v1524 = vor.u32 %v1523, %v1519
        %v1525 = vrot.slane %v1524, 4
        %v1527 = vshll.u32 %v1464, 16
        %v1529 = vrot.slane %v1527, 5
        %v1530 = vsel %vm381, %v1525, %v1529
        %v1531 = vshrl.u32 %v1464, 16
        %v1533 = vrot.slane %v1531, 4
        %v1534 = vor.u32 %v1533, %v1529
        %v1535 = vrot.slane %v1534, 4
        %v1537 = vshll.u32 %v1465, 16
        %v1539 = vrot.slane %v1537, 5
        %v1540 = vsel %vm381, %v1535, %v1539
        %v1541 = vshrl.u32 %v1465, 16
        %v1543 = vrot.slane %v1541, 4
        %v1544 = vor.u32 %v1543, %v1539
        %v1545 = vrot.slane %v1544, 4
        %v1547 = vshll.u32 %v1466, 16
        %v1549 = vrot.slane %v1547, 5
        %v1550 = vsel %vm381, %v1545, %v1549
        %1559 = vst.msk [vmem:[#allocation3 + $0x4] sm:$0xf] %vm172, %v1480
        %1560 = vst.msk [vmem:[#allocation3 + $0xc] sm:$0xf] %vm172, %v1490
        %1561 = vst.msk [vmem:[#allocation3 + $0x14] sm:$0xf] %vm172, %v1500
        %1562 = vst.msk [vmem:[#allocation3 + $0x1c] sm:$0xf] %vm172, %v1510
        %1563 = vst.msk [vmem:[#allocation3 + $0x24] sm:$0xf] %vm172, %v1520
        %1564 = vst.msk [vmem:[#allocation3 + $0x2c] sm:$0xf] %vm172, %v1530
        %1565 = vst.msk [vmem:[#allocation3 + $0x34] sm:$0xf] %vm172, %v1540
        %1566 = vst.msk [vmem:[#allocation3 + $0x3c] sm:$0xf] %vm172, %v1550
        %v1567 = vld [vmem:[#allocation3] sm:$0xff]
        %v1568 = vld [vmem:[#allocation3 + $0x8] sm:$0xff]
        %v1569 = vld [vmem:[#allocation3 + $0x10] sm:$0xff]
        %v1570 = vld [vmem:[#allocation3 + $0x18] sm:$0xff]
        %v1571 = vld [vmem:[#allocation3 + $0x20] sm:$0xff]
        %v1572 = vld [vmem:[#allocation3 + $0x28] sm:$0xff]
        %v1573 = vld [vmem:[#allocation3 + $0x30] sm:$0xff]
        %v1574 = vld [vmem:[#allocation3 + $0x38] sm:$0xff]
        %v1575 = vld [vmem:[%s1] sm:$0xf]
        %v1576 = vld [vmem:[%s1 + $0x4] sm:$0xf]
        %v1577 = vld [vmem:[%s1 + $0x8] sm:$0xf]
        %v1578 = vld [vmem:[%s1 + $0xc] sm:$0xf]
        %v1579 = vld [vmem:[%s1 + $0x10] sm:$0xf]
        %v1580 = vld [vmem:[%s1 + $0x14] sm:$0xf]
        %v1581 = vld [vmem:[%s1 + $0x18] sm:$0xf]
        %v1582 = vld [vmem:[%s1 + $0x1c] sm:$0xf]
        %v1583 = vld [vmem:[%s1 + $0x20] sm:$0xf]
        %v1584 = vld [vmem:[%s1 + $0x24] sm:$0xf]
        %v1585 = vld [vmem:[%s1 + $0x28] sm:$0xf]
        %v1586 = vld [vmem:[%s1 + $0x2c] sm:$0xf]
        %v1587 = vld [vmem:[%s1 + $0x30] sm:$0xf]
        %v1588 = vld [vmem:[%s1 + $0x34] sm:$0xf]
        %v1589 = vld [vmem:[%s1 + $0x38] sm:$0xf]
        %v1590 = vld [vmem:[%s1 + $0x3c] sm:$0xf]
        %v1591 = vld [vmem:[%s1 + $0x40] sm:$0xf]
        %v1592 = vld [vmem:[%s1 + $0x44] sm:$0xf]
        %v1593 = vld [vmem:[%s2] sm:$0x1]
        %v1595 = vperm.slane %v1593, 0
        %v1605 = vunpack.c.l.b16 %v1567
        %v1606 = vunpack.c.h.b16 %v1567
        %v1607 = vunpack.c.l.b16 %v1568
        %v1608 = vunpack.c.h.b16 %v1568
        %v1609 = vunpack.c.l.b16 %v1569
        %v1610 = vunpack.c.h.b16 %v1569
        %v1611 = vunpack.c.l.b16 %v1570
        %v1612 = vunpack.c.h.b16 %v1570
        %v1613 = vunpack.c.l.b16 %v1571
        %v1614 = vunpack.c.h.b16 %v1571
        %v1615 = vunpack.c.l.b16 %v1572
        %v1616 = vunpack.c.h.b16 %v1572
        %v1617 = vunpack.c.l.b16 %v1573
        %v1618 = vunpack.c.h.b16 %v1573
        %v1619 = vunpack.c.l.b16 %v1574
        %v1620 = vunpack.c.h.b16 %v1574
        %v1621 = vpack.c.b16 %v1607, %v1605
        %v1622 = vpack.c.b16 %v1608, %v1606
        %v1623 = vpack.c.b16 %v1611, %v1609
        %v1624 = vpack.c.b16 %v1612, %v1610
        %v1625 = vpack.c.b16 %v1615, %v1613
        %v1626 = vpack.c.b16 %v1616, %v1614
        %v1627 = vpack.c.b16 %v1619, %v1617
        %v1628 = vpack.c.b16 %v1620, %v1618
        %v1651 = vunpack.c.l.b16 %v1575
        %v1652 = vunpack.c.l.b16 %v1576
        %v1653 = vunpack.c.l.b16 %v1577
        %v1654 = vunpack.c.l.b16 %v1578
        %v1655 = vunpack.c.l.b16 %v1579
        %v1656 = vunpack.c.l.b16 %v1580
        %v1657 = vunpack.c.l.b16 %v1581
        %v1658 = vunpack.c.l.b16 %v1582
        %v1659 = vunpack.c.l.b16 %v1583
        %v1660 = vunpack.c.l.b16 %v1584
        %v1661 = vunpack.c.l.b16 %v1585
        %v1662 = vunpack.c.l.b16 %v1586
        %v1663 = vunpack.c.l.b16 %v1587
        %v1664 = vunpack.c.l.b16 %v1588
        %v1665 = vunpack.c.l.b16 %v1589
        %v1666 = vunpack.c.l.b16 %v1590
        %v1667 = vunpack.c.l.b16 %v1591
        %v1668 = vunpack.c.l.b16 %v1592
        %v1669 = vpack.c.b16 %v1652, %v1651
        %v1670 = vpack.c.b16 %v1654, %v1653
        %v1671 = vpack.c.b16 %v1656, %v1655
        %v1672 = vpack.c.b16 %v1658, %v1657
        %v1673 = vpack.c.b16 %v1660, %v1659
        %v1674 = vpack.c.b16 %v1662, %v1661
        %v1675 = vpack.c.b16 %v1664, %v1663
        %v1676 = vpack.c.b16 %v1666, %v1665
        %v1677 = vpack.c.b16 %v1668, %v1667
        %vm1687 = vcmask 130048
        %v1689 = vsel %vm1687, %v1622, 0
        %v1692 = vsel %vm1687, %v1624, 0
        %v1695 = vsel %vm1687, %v1626, 0
        %v1698 = vsel %vm1687, %v1628, 0
        %1700 = vmatpush.bf16.msra.mxu0 %v1676
        %1701 = vmatpush.bf16.msra.mxu0 %v1675
        %1702 = vmatpush.bf16.msra.mxu0 %v1674
        %1703 = vmatpush.bf16.msra.mxu0 %v1673
        %1704 = vmatpush.bf16.msra.mxu0 %v1672
        %1705 = vmatpush.bf16.msra.mxu0 %v1671
        %1706 = vmatpush.bf16.msra.mxu0 %v1670
        %1707 = vmatpush.bf16.msra.mxu0 %v1669
        %1708 = vmatmul.bf16.gmra.mxu0 %v1621
        %v1709 = vpop.f32.mrf.mxu0
        %v1710 = vadd.f32 %v1595, %v1709
        %v1711 = vpop.f32.mrf.mxu0
        %v1712 = vadd.f32 %v1595, %v1711
        %1713 = vmatmul.bf16.gmra.mxu0 %v1623
        %v1714 = vpop.f32.mrf.mxu0
        %v1715 = vadd.f32 %v1595, %v1714
        %v1716 = vpop.f32.mrf.mxu0
        %v1717 = vadd.f32 %v1595, %v1716
        %1718 = vmatmul.bf16.gmra.mxu0 %v1625
        %v1719 = vpop.f32.mrf.mxu0
        %v1720 = vadd.f32 %v1595, %v1719
        %v1721 = vpop.f32.mrf.mxu0
        %v1722 = vadd.f32 %v1595, %v1721
        %1723 = vmatmul.bf16.gmra.mxu0 %v1627
        %v1724 = vpop.f32.mrf.mxu0
        %v1725 = vadd.f32 %v1595, %v1724
        %v1726 = vpop.f32.mrf.mxu0
        %v1727 = vadd.f32 %v1595, %v1726
        %1728 = vdwg.mxu0
        %1729 = vmatpush.bf16.msra.mxu0 0
        %1730 = vmatpush.bf16.msra.mxu0 0
        %1731 = vmatpush.bf16.msra.mxu0 0
        %1732 = vmatpush.bf16.msra.mxu0 0
        %1733 = vmatpush.bf16.msra.mxu0 0
        %1734 = vmatpush.bf16.msra.mxu0 0
        %1735 = vmatpush.bf16.msra.mxu0 0
        %1736 = vmatpush.bf16.msra.mxu0 %v1677
        %1737 = vmatmul.bf16.gmra.mxu0 %v1689
        %v1738 = vpop.f32.mrf.mxu0
        %v1739 = vadd.f32 %v1710, %v1738
        %v1740 = vpop.f32.mrf.mxu0
        %v1741 = vadd.f32 %v1712, %v1740
        %1742 = vmatmul.bf16.gmra.mxu0 %v1692
        %v1743 = vpop.f32.mrf.mxu0
        %v1744 = vadd.f32 %v1715, %v1743
        %v1745 = vpop.f32.mrf.mxu0
        %v1746 = vadd.f32 %v1717, %v1745
        %1747 = vmatmul.bf16.gmra.mxu0 %v1695
        %v1748 = vpop.f32.mrf.mxu0
        %v1749 = vadd.f32 %v1720, %v1748
        %v1750 = vpop.f32.mrf.mxu0
        %v1751 = vadd.f32 %v1722, %v1750
        %1752 = vmatmul.bf16.gmra.mxu0 %v1698
        %v1753 = vpop.f32.mrf.mxu0
        %v1754 = vadd.f32 %v1725, %v1753
        %v1755 = vpop.f32.mrf.mxu0
        %v1756 = vadd.f32 %v1727, %v1755
        %1757 = vdwg.mxu0
        %vm1758 = vcmask 523264
        %1759 = vst.msk [vmem:[%s163] sm:$0xff] %vm1758, %v1739
        %1760 = vst.msk [vmem:[%s163 + $0x8] sm:$0xff] %vm1758, %v1741
        %1761 = vst.msk [vmem:[%s163 + $0x10] sm:$0xff] %vm1758, %v1744
        %1762 = vst.msk [vmem:[%s163 + $0x18] sm:$0xff] %vm1758, %v1746
        %1763 = vst.msk [vmem:[%s163 + $0x20] sm:$0xff] %vm1758, %v1749
        %1764 = vst.msk [vmem:[%s163 + $0x28] sm:$0xff] %vm1758, %v1751
        %1765 = vst.msk [vmem:[%s163 + $0x30] sm:$0xff] %vm1758, %v1754
        %1766 = vst.msk [vmem:[%s163 + $0x38] sm:$0xff] %vm1758, %v1756
        %s1767 = sand.u32 %s93, 1
        %s1768 = scalar_lea.sflag [#allocation5], %s1767
        %s1769 = sand.u32 %s93, 1
        %s1770 = smul.addr %s1769, 64
        %s1771 = scalar_lea.vmem [#allocation4], %s1770
        // Predicated region
        $region33: #{tpu_custom_call.1} parent=31 // pred_check
          %p1772 = pneg %p103
        $region34: #{tpu_custom_call.1} parent=31 // pred_check_branch
          %1774 = sbr.rel (%p1772) target = $region36
        $region35: #{tpu_custom_call.1} parent=31 // pred_region
          %1776 = vsyncadd %s1768, 0
          %s1777 = smul.addr %s17, 8
          %s1778 = smul.addr %s1777, 8
          %s1779 = scalar_lea.hbm %s3, %s1778
          %s1780 = sshll.u32 %s1771, 4
          %s1781 = int_to_ptr.vmem [resolvable:$true] %s1780
          %s1782 = sshll.u32 %s1779, 4
          %s1783 = int_to_ptr.hbm [resolvable:$true] %s1782
          %1788 = dma.vmem_to_hbm [thread:$0]  %s1781, 1024, %s1783, %s1768, 128, 128, 8
        $region36: #{tpu_custom_call.1} parent=31 // pred_fallthru
          _
      $region32: #{tpu_custom_call.1} parent=5 // pred_fallthru
        _
      %p1789 = scmp.le.s32.totalorder 2, %s12
      // Predicated region
      $region37: #{tpu_custom_call.1} parent=5 // pred_check
        %p1790 = pneg %p1789
      $region38: #{tpu_custom_call.1} parent=5 // pred_check_branch
        %1792 = sbr.rel (%p1790) target = $region40
      $region39: #{tpu_custom_call.1} parent=5 // pred_region
        %s1793 = ssub.s32 %s12, 2
        // Predicated region
        $region41: #{tpu_custom_call.1} parent=39 // pred_check
          %p1794 = pneg %p109
        $region42: #{tpu_custom_call.1} parent=39 // pred_check_branch
          %1796 = sbr.rel (%p1794) target = $region44
        $region43: #{tpu_custom_call.1} parent=39 // pred_region
          %s1797 = sand.u32 %s94, 1
          %s1798 = scalar_lea.sflag [#allocation5], %s1797
          %s1799 = sand.u32 %s94, 1
          %s1800 = smul.addr %s1799, 64
          %s1801 = scalar_lea.vmem [#allocation4], %s1800
          %1803 = dma.done %s1798, 1024
        $region44: #{tpu_custom_call.1} parent=39 // pred_fallthru
          _
      $region40: #{tpu_custom_call.1} parent=5 // pred_fallthru
        _
    $region6: #{tpu_custom_call.1} parent=1 // loop_footer
      %s16 = sadd.s32 1, %s12
    $region7: #{tpu_custom_call.1} parent=1 // loop_footer_branch
      %11 = sbr.rel target = $region3
    $region8: #{tpu_custom_call.1} parent=1 // loop_exit
      _
    %1804 = vsyncpa [#allocation5], 1
    %s1805 = scalar_lea.sflag [#allocation5], 1
    %1806 = vsyncpa %s1805, 1

</llo_original>
